<compile_context>
chip_gen: v5e
topology: v5e:2x2
jax: 0.10.0
libtpu: 0.0.40
codegen_flags: <defaults>
</compile_context>

<pallas_src>
import functools

import jax
import jax.numpy as jnp
from jax import lax
from jax.experimental import pallas as pl
from jax.experimental.pallas import tpu as pltpu

_LANE = 128
_SUBLANE = 8


def _round_up(x, m):
    return ((x + m - 1) // m) * m


# ----------------------------- Pallas kernel --------------------------------

def _fused_forward_kernel(ids_ref, emb_ref, wih_ref, whh_ref, b_ref,
                          wcls_ref, bcls_ref, out_ref, act_ref, proj_ref,
                          *, T, Bp, H, compute_dtype=jnp.float32):
    """Fused embedding + multi-layer LSTM + linear classifier (one invocation).

    ids_ref  : (N, 1)       time-major padded token ids (pad id = 0)
    emb_ref  : (V, Dmax)    embedding table (columns padded to Dmax)
    wih_ref  : (L, Dmax, G4) packed gates [i|f|g|o]; only 4H dim padded to G4
    whh_ref  : (L, H, G4)
    b_ref    : (L, 1, G4)    b_ih + b_hh
    wcls_ref : (H, Cp)
    bcls_ref : (1, Cp)
    out_ref  : (N, Cp)       logits (lane-dense store)
    act_ref  : VMEM scratch (N, H)   layer-output slab (h_t for all steps)
    proj_ref : VMEM scratch (N, G4)  batched x @ W_ih + bias
    """
    N = T * Bp
    V = emb_ref.shape[0]
    L = wih_ref.shape[0]
    G4 = whh_ref.shape[2]

    # Fused embedding lookup: one-hot(ids) @ table on the MXU (exact in f32).
    ids = ids_ref[...]                                          # (N, 1) int32
    onehot = (lax.broadcasted_iota(jnp.int32, (N, V), 1) == ids)
    x_val = jnp.dot(onehot.astype(compute_dtype),
                    emb_ref[...].astype(compute_dtype),
                    preferred_element_type=jnp.float32)         # (N, Dmax)

    # Lane mask selecting the 'g' gate block (tanh) inside the packed 4H lanes.
    lane = lax.broadcasted_iota(jnp.int32, (Bp, G4), 1)
    g_sel = (lane >= 2 * H) & (lane < 3 * H)

    for layer in range(L):                                      # static unroll
        w_hh = whh_ref[layer].astype(compute_dtype)             # (H, G4)
        bias = b_ref[layer]                                     # (1, G4)

        # Time-independent input projection for all T steps in ONE MXU call;
        # bias folded in once (nothing broadcast inside the recurrent loop).
        if layer == 0:
            src = x_val                                         # (N, Dmax)
            w_ih = wih_ref[0].astype(compute_dtype)             # (Dmax, G4)
        else:
            src = act_ref[...]                                  # (N, H)
            w_ih = wih_ref[layer][:H, :].astype(compute_dtype)  # (H, G4)
        proj_ref[...] = (jnp.dot(src.astype(compute_dtype), w_ih,
                                 preferred_element_type=jnp.float32) + bias)

        def step(t, carry, w_hh=w_hh):
            h, c = carry
            row = pl.multiple_of(t * Bp, Bp)
            gates = (proj_ref[pl.ds(row, Bp), :]
                     + jnp.dot(h.astype(compute_dtype), w_hh,
                               preferred_element_type=jnp.float32))  # (Bp, G4)
            # Single masked tanh/sigmoid pass over the packed gate vreg.
            acts = jnp.where(g_sel, jnp.tanh(gates), jax.nn.sigmoid(gates))
            i_g = acts[:, 0 * H:1 * H]
            f_g = acts[:, 1 * H:2 * H]
            g_g = acts[:, 2 * H:3 * H]
            o_g = acts[:, 3 * H:4 * H]
            c_new = f_g * c + i_g * g_g
            h_new = o_g * jnp.tanh(c_new)
            act_ref[pl.ds(row, Bp), :] = h_new
            return (h_new, c_new)

        zeros = jnp.zeros((Bp, H), jnp.float32)
        lax.fori_loop(0, T, step, (zeros, zeros),
                      unroll=True if T <= 32 else 8)

    # Classifier over the whole (N, H) slab: one matmul, lane-dense store.
    out_ref[...] = (jnp.dot(act_ref[...].astype(compute_dtype),
                            wcls_ref[...].astype(compute_dtype),
                            preferred_element_type=jnp.float32)
                    + bcls_ref[...])


def _fused_forward_call(ids_col, emb, wih, whh, b, wcls, bcls, *, T, Bp, H):
    N = T * Bp
    V, Dmax = emb.shape
    L = wih.shape[0]
    G4 = whh.shape[2]
    Cp = wcls.shape[1]
    kernel = functools.partial(_fused_forward_kernel, T=T, Bp=Bp, H=H)
    return pl.pallas_call(
        kernel,
        out_shape=jax.ShapeDtypeStruct((N, Cp), jnp.float32),
        in_specs=[
            pl.BlockSpec((N, 1), lambda: (0, 0)),             # token ids
            pl.BlockSpec((V, Dmax), lambda: (0, 0)),          # embedding table
            pl.BlockSpec((L, Dmax, G4), lambda: (0, 0, 0)),
            pl.BlockSpec((L, H, G4), lambda: (0, 0, 0)),
            pl.BlockSpec((L, 1, G4), lambda: (0, 0, 0)),
            pl.BlockSpec((H, Cp), lambda: (0, 0)),
            pl.BlockSpec((1, Cp), lambda: (0, 0)),
        ],
        out_specs=pl.BlockSpec((N, Cp), lambda: (0, 0)),
        scratch_shapes=[
            pltpu.VMEM((N, H), jnp.float32),       # layer-output slab
            pltpu.VMEM((N, G4), jnp.float32),      # batched input projection
        ],
        compiler_params=pltpu.CompilerParams(
            vmem_limit_bytes=32 * 1024 * 1024),
    )(ids_col, emb, wih, whh, b, wcls, bcls)


# ------------------------------- Params --------------------------------------

def init_params(key, *, vocab_size, embed_size, hidden_size, num_layer,
                class_num):
    H = hidden_size
    Ein = embed_size
    Dmax = max(Ein, H)
    G4 = _round_up(4 * H, _LANE)
    Cp = _round_up(class_num, _LANE)

    keys = jax.random.split(key, 1 + 4 * num_layer + 2)
    kidx = 0

    # Embedding: N(0,1) like torch, padding_idx=0 row zeroed. max_norm=1 renorm
    # precomputed once (param-only; identical results for this inference path).
    emb = jax.random.normal(keys[kidx], (vocab_size, embed_size), jnp.float32)
    kidx += 1
    emb = emb.at[0].set(0.0)
    norms = jnp.sqrt(jnp.sum(emb * emb, axis=-1, keepdims=True))
    emb = emb * jnp.where(norms > 1.0, 1.0 / (norms + 1e-7), 1.0)
    emb_p = jnp.zeros((vocab_size, Dmax), jnp.float32).at[:, :embed_size].set(emb)

    bound = 1.0 / float(hidden_size) ** 0.5
    wih_l, whh_l, b_l, raw_lstm = [], [], [], []
    for layer in range(num_layer):
        e_in = embed_size if layer == 0 else hidden_size
        w_ih = jax.random.uniform(keys[kidx], (4 * H, e_in),
                                  minval=-bound, maxval=bound,
                                  dtype=jnp.float32); kidx += 1
        w_hh = jax.random.uniform(keys[kidx], (4 * H, H),
                                  minval=-bound, maxval=bound,
                                  dtype=jnp.float32); kidx += 1
        b_ih = jax.random.uniform(keys[kidx], (4 * H,),
                                  minval=-bound, maxval=bound,
                                  dtype=jnp.float32); kidx += 1
        b_hh = jax.random.uniform(keys[kidx], (4 * H,),
                                  minval=-bound, maxval=bound,
                                  dtype=jnp.float32); kidx += 1
        raw_lstm.append((w_ih, w_hh, b_ih, b_hh))

        # Contiguous [i|f|g|o] packing; only the concatenated 4H dim is padded.
        wih_p = jnp.zeros((Dmax, G4), jnp.float32).at[:e_in, :4 * H].set(w_ih.T)
        whh_p = jnp.zeros((H, G4), jnp.float32).at[:, :4 * H].set(w_hh.T)
        b_p = jnp.zeros((1, G4), jnp.float32).at[:, :4 * H].set(b_ih + b_hh)
        wih_l.append(wih_p)
        whh_l.append(whh_p)
        b_l.append(b_p)

    w_cls = jax.random.uniform(keys[kidx], (class_num, H),
                               minval=-bound, maxval=bound,
                               dtype=jnp.float32); kidx += 1
    b_cls = jax.random.uniform(keys[kidx], (class_num,),
                               minval=-bound, maxval=bound,
                               dtype=jnp.float32); kidx += 1
    wcls_p = jnp.zeros((H, Cp), jnp.float32).at[:, :class_num].set(w_cls.T)
    bcls_p = jnp.zeros((1, Cp), jnp.float32).at[0, :class_num].set(b_cls)

    params = {"emb": emb_p, "wih": jnp.stack(wih_l), "whh": jnp.stack(whh_l),
              "b": jnp.stack(b_l), "wcls": wcls_p, "bcls": bcls_p}
    raw = {"emb": emb, "lstm": raw_lstm, "w_cls": w_cls, "b_cls": b_cls}
    return params, raw


# ------------------------------- Forward --------------------------------------

@functools.partial(jax.jit, static_argnames=("class_num",))
def forward(params, token_ids, *, class_num):
    """token_ids: (B, T) int32 -> logits (B, T, class_num). Inference (y=None)."""
    B, T = token_ids.shape
    H = params["whh"].shape[1]
    Cp = params["wcls"].shape[1]
    Bp = _round_up(B, _SUBLANE)

    # Tiny int32 preamble only: time-major id column padded with 0 (padding_idx
    # whose embedding row is zero). The embedding gather itself runs in-kernel.
    ids = jnp.transpose(token_ids.astype(jnp.int32), (1, 0))     # (T, B)
    if Bp != B:
        ids = jnp.pad(ids, ((0, 0), (0, Bp - B)))
    ids_col = ids.reshape(T * Bp, 1)

    logits_p = _fused_forward_call(ids_col, params["emb"], params["wih"],
                                   params["whh"], params["b"],
                                   params["wcls"], params["bcls"],
                                   T=T, Bp=Bp, H=H)               # (T*Bp, Cp)
    logits = logits_p.reshape(T, Bp, Cp)[:, :B, :class_num]
    return jnp.transpose(logits, (1, 0, 2))                       # (B, T, C)


# Pure-JAX reference (PyTorch LSTM semantics) for a correctness check.
def _reference_forward(raw, token_ids):
    x = jnp.take(raw["emb"], token_ids, axis=0)                   # (B, T, E)
    B = x.shape[0]
    h_seq = x
    for (w_ih, w_hh, b_ih, b_hh) in raw["lstm"]:
        H = w_hh.shape[1]

        def step(carry, x_t, w_ih=w_ih, w_hh=w_hh, b_ih=b_ih, b_hh=b_hh, H=H):
            h, c = carry
            gates = x_t @ w_ih.T + b_ih + h @ w_hh.T + b_hh
            i = jax.nn.sigmoid(gates[:, 0 * H:1 * H])
            f = jax.nn.sigmoid(gates[:, 1 * H:2 * H])
            g = jnp.tanh(gates[:, 2 * H:3 * H])
            o = jax.nn.sigmoid(gates[:, 3 * H:4 * H])
            c = f * c + i * g
            h = o * jnp.tanh(c)
            return (h, c), h

        x_tm = jnp.transpose(h_seq, (1, 0, 2))
        (_, _), hs = lax.scan(step, (jnp.zeros((B, H)), jnp.zeros((B, H))), x_tm)
        h_seq = jnp.transpose(hs, (1, 0, 2))
    return h_seq @ raw["w_cls"].T + raw["b_cls"]


# --------------------------------- Main ---------------------------------------

if __name__ == "__main__":
    cfg = dict(model_type="lstm", vocab_size=32, embed_size=16,
               hidden_size=32, num_layer=2, class_num=2)
    B, T = 2, 8

    key = jax.random.PRNGKey(0)
    pkey, xkey = jax.random.split(key)
    params, raw = init_params(pkey,
                              vocab_size=cfg["vocab_size"],
                              embed_size=cfg["embed_size"],
                              hidden_size=cfg["hidden_size"],
                              num_layer=cfg["num_layer"],
                              class_num=cfg["class_num"])

    token_ids = jax.random.randint(xkey, (B, T), 0, cfg["vocab_size"],
                                   dtype=jnp.int32)

    logits = forward(params, token_ids, class_num=cfg["class_num"])
    jax.block_until_ready(logits)

    assert logits.shape == (B, T, cfg["class_num"])
    assert logits.dtype == jnp.float32

    ref = _reference_forward(raw, token_ids)
    max_err = float(jnp.max(jnp.abs(logits - ref)))
    assert max_err < 1e-4, f"mismatch vs reference: {max_err}"

    print("KERNEL_OK")
</pallas_src>

<mosaic_0001>
module attributes {stable_mosaic.version = 11 : i64} {
  func.func @_fused_forward_kernel(%arg0: memref<64x1xi32, #tpu.memory_space<vmem>>, %arg1: memref<32x32xf32, #tpu.memory_space<vmem>>, %arg2: memref<2x32x128xf32, #tpu.memory_space<vmem>>, %arg3: memref<2x32x128xf32, #tpu.memory_space<vmem>>, %arg4: memref<2x1x128xf32, #tpu.memory_space<vmem>>, %arg5: memref<32x128xf32, #tpu.memory_space<vmem>>, %arg6: memref<1x128xf32, #tpu.memory_space<vmem>>, %arg7: memref<64x128xf32, #tpu.memory_space<vmem>>, %arg8: memref<64x32xf32, #tpu.memory_space<vmem>>, %arg9: memref<64x128xf32, #tpu.memory_space<vmem>>) attributes {dimension_semantics = [], scalar_prefetch = 0 : i64, scratch_operands = 2 : i64, tpu.core_type = #tpu.core_type<tc>} {
    %c0 = arith.constant 0 : index
    %c0_0 = arith.constant 0 : index
    %0 = vector.load %arg0[%c0, %c0_0] : memref<64x1xi32, #tpu.memory_space<vmem>>, vector<64x1xi32>
    %1 = tpu.iota {dimensions = array<i32: 1>} : vector<64x32xi32>
    %2 = vector.broadcast %0 : vector<64x1xi32> to vector<64x32xi32>
    %3 = arith.cmpi eq, %1, %2 : vector<64x32xi32>
    %4 = arith.extui %3 : vector<64x32xi1> to vector<64x32xi32>
    %5 = arith.sitofp %4 : vector<64x32xi32> to vector<64x32xf32>
    %c0_1 = arith.constant 0 : index
    %c0_2 = arith.constant 0 : index
    %6 = vector.load %arg1[%c0_1, %c0_2] : memref<32x32xf32, #tpu.memory_space<vmem>>, vector<32x32xf32>
    %cst = arith.constant dense<0.000000e+00> : vector<64x32xf32>
    %7 = tpu.matmul %5, %6, %cst {dimension_numbers = #tpu.dot_dimension_numbers<[1], [0], [0], [1], [0, 0, 1, 1], [], []>} : vector<64x32xf32>, vector<32x32xf32>, vector<64x32xf32> -> vector<64x32xf32>
    %8 = tpu.iota {dimensions = array<i32: 1>} : vector<8x128xi32>
    %c64_i32 = arith.constant 64 : i32
    %9 = vector.broadcast %c64_i32 : i32 to vector<8x128xi32>
    %10 = arith.cmpi sge, %8, %9 : vector<8x128xi32>
    %c96_i32 = arith.constant 96 : i32
    %11 = vector.broadcast %c96_i32 : i32 to vector<8x128xi32>
    %12 = arith.cmpi slt, %8, %11 : vector<8x128xi32>
    %13 = arith.andi %10, %12 : vector<8x128xi1>
    %c0_3 = arith.constant 0 : index
    %c0_4 = arith.constant 0 : index
    %c0_5 = arith.constant 0 : index
    %14 = vector.load %arg3[%c0_3, %c0_4, %c0_5] : memref<2x32x128xf32, #tpu.memory_space<vmem>>, vector<1x32x128xf32>
    %15 = vector.shape_cast %14 : vector<1x32x128xf32> to vector<32x128xf32>
    %c0_6 = arith.constant 0 : index
    %c0_7 = arith.constant 0 : index
    %c0_8 = arith.constant 0 : index
    %16 = vector.load %arg4[%c0_6, %c0_7, %c0_8] : memref<2x1x128xf32, #tpu.memory_space<vmem>>, vector<1x1x128xf32>
    %17 = vector.shape_cast %16 : vector<1x1x128xf32> to vector<1x128xf32>
    %c0_9 = arith.constant 0 : index
    %c0_10 = arith.constant 0 : index
    %c0_11 = arith.constant 0 : index
    %18 = vector.load %arg2[%c0_9, %c0_10, %c0_11] : memref<2x32x128xf32, #tpu.memory_space<vmem>>, vector<1x32x128xf32>
    %19 = vector.shape_cast %18 : vector<1x32x128xf32> to vector<32x128xf32>
    %cst_12 = arith.constant dense<0.000000e+00> : vector<64x128xf32>
    %20 = tpu.matmul %7, %19, %cst_12 {dimension_numbers = #tpu.dot_dimension_numbers<[1], [0], [0], [1], [0, 0, 1, 1], [], []>} : vector<64x32xf32>, vector<32x128xf32>, vector<64x128xf32> -> vector<64x128xf32>
    %21 = vector.broadcast %17 : vector<1x128xf32> to vector<64x128xf32>
    %22 = arith.addf %20, %21 : vector<64x128xf32>
    %c0_13 = arith.constant 0 : index
    %c0_14 = arith.constant 0 : index
    %23 = vector.load %arg9[%c0_13, %c0_14] : memref<64x128xf32, #tpu.memory_space<vmem>>, vector<64x128xf32>
    tpu.vector_store %arg9[%c0_13, %c0_14], %22 {strides = array<i32>} : memref<64x128xf32, #tpu.memory_space<vmem>>, vector<64x128xf32>,
    %cst_15 = arith.constant 0.000000e+00 : f32
    %24 = vector.broadcast %cst_15 : f32 to vector<8x32xf32>
    %c0_i32 = arith.constant 0 : i32
    %c8_i32 = arith.constant 8 : i32
    %25 = arith.muli %c0_i32, %c8_i32 : i32
    %26 = tpu.assume_multiple %25, 8 : i32
    %27 = arith.index_cast %26 : i32 to index
    %c0_16 = arith.constant 0 : index
    %28 = vector.load %arg9[%27, %c0_16] : memref<64x128xf32, #tpu.memory_space<vmem>>, vector<8x128xf32>
    %cst_17 = arith.constant dense<0.000000e+00> : vector<8x128xf32>
    %29 = tpu.matmul %24, %15, %cst_17 {dimension_numbers = #tpu.dot_dimension_numbers<[1], [0], [0], [1], [0, 0, 1, 1], [], []>} : vector<8x32xf32>, vector<32x128xf32>, vector<8x128xf32> -> vector<8x128xf32>
    %30 = arith.addf %28, %29 : vector<8x128xf32>
    %31 = math.tanh %30 : vector<8x128xf32>
    %32 = arith.negf %30 : vector<8x128xf32>
    %33 = math.exp %32 : vector<8x128xf32>
    %cst_18 = arith.constant 1.000000e+00 : f32
    %34 = vector.broadcast %cst_18 : f32 to vector<8x128xf32>
    %35 = arith.addf %34, %33 : vector<8x128xf32>
    %36 = arith.divf %34, %35 : vector<8x128xf32>
    %37 = arith.select %13, %31, %36 : vector<8x128xi1>, vector<8x128xf32>
    %38 = vector.extract_strided_slice %37 {offsets = [0, 0], sizes = [8, 32], strides = [1, 1]} : vector<8x128xf32> to vector<8x32xf32>
    %39 = vector.extract_strided_slice %37 {offsets = [0, 32], sizes = [8, 32], strides = [1, 1]} : vector<8x128xf32> to vector<8x32xf32>
    %40 = vector.extract_strided_slice %37 {offsets = [0, 64], sizes = [8, 32], strides = [1, 1]} : vector<8x128xf32> to vector<8x32xf32>
    %41 = vector.extract_strided_slice %37 {offsets = [0, 96], sizes = [8, 32], strides = [1, 1]} : vector<8x128xf32> to vector<8x32xf32>
    %42 = arith.mulf %39, %24 : vector<8x32xf32>
    %43 = arith.mulf %38, %40 : vector<8x32xf32>
    %44 = arith.addf %42, %43 : vector<8x32xf32>
    %45 = math.tanh %44 : vector<8x32xf32>
    %46 = arith.mulf %41, %45 : vector<8x32xf32>
    %47 = arith.index_cast %26 : i32 to index
    %c0_19 = arith.constant 0 : index
    %48 = vector.load %arg8[%47, %c0_19] : memref<64x32xf32, #tpu.memory_space<vmem>>, vector<8x32xf32>
    tpu.vector_store %arg8[%47, %c0_19], %46 {strides = array<i32>} : memref<64x32xf32, #tpu.memory_space<vmem>>, vector<8x32xf32>,
    %c1_i32 = arith.constant 1 : i32
    %c8_i32_20 = arith.constant 8 : i32
    %49 = arith.muli %c1_i32, %c8_i32_20 : i32
    %50 = tpu.assume_multiple %49, 8 : i32
    %51 = arith.index_cast %50 : i32 to index
    %c0_21 = arith.constant 0 : index
    %52 = vector.load %arg9[%51, %c0_21] : memref<64x128xf32, #tpu.memory_space<vmem>>, vector<8x128xf32>
    %cst_22 = arith.constant dense<0.000000e+00> : vector<8x128xf32>
    %53 = tpu.matmul %46, %15, %cst_22 {dimension_numbers = #tpu.dot_dimension_numbers<[1], [0], [0], [1], [0, 0, 1, 1], [], []>} : vector<8x32xf32>, vector<32x128xf32>, vector<8x128xf32> -> vector<8x128xf32>
    %54 = arith.addf %52, %53 : vector<8x128xf32>
    %55 = math.tanh %54 : vector<8x128xf32>
    %56 = arith.negf %54 : vector<8x128xf32>
    %57 = math.exp %56 : vector<8x128xf32>
    %cst_23 = arith.constant 1.000000e+00 : f32
    %58 = vector.broadcast %cst_23 : f32 to vector<8x128xf32>
    %59 = arith.addf %58, %57 : vector<8x128xf32>
    %60 = arith.divf %58, %59 : vector<8x128xf32>
    %61 = arith.select %13, %55, %60 : vector<8x128xi1>, vector<8x128xf32>
    %62 = vector.extract_strided_slice %61 {offsets = [0, 0], sizes = [8, 32], strides = [1, 1]} : vector<8x128xf32> to vector<8x32xf32>
    %63 = vector.extract_strided_slice %61 {offsets = [0, 32], sizes = [8, 32], strides = [1, 1]} : vector<8x128xf32> to vector<8x32xf32>
    %64 = vector.extract_strided_slice %61 {offsets = [0, 64], sizes = [8, 32], strides = [1, 1]} : vector<8x128xf32> to vector<8x32xf32>
    %65 = vector.extract_strided_slice %61 {offsets = [0, 96], sizes = [8, 32], strides = [1, 1]} : vector<8x128xf32> to vector<8x32xf32>
    %66 = arith.mulf %63, %44 : vector<8x32xf32>
    %67 = arith.mulf %62, %64 : vector<8x32xf32>
    %68 = arith.addf %66, %67 : vector<8x32xf32>
    %69 = math.tanh %68 : vector<8x32xf32>
    %70 = arith.mulf %65, %69 : vector<8x32xf32>
    %71 = arith.index_cast %50 : i32 to index
    %c0_24 = arith.constant 0 : index
    %72 = vector.load %arg8[%71, %c0_24] : memref<64x32xf32, #tpu.memory_space<vmem>>, vector<8x32xf32>
    tpu.vector_store %arg8[%71, %c0_24], %70 {strides = array<i32>} : memref<64x32xf32, #tpu.memory_space<vmem>>, vector<8x32xf32>,
    %c2_i32 = arith.constant 2 : i32
    %c8_i32_25 = arith.constant 8 : i32
    %73 = arith.muli %c2_i32, %c8_i32_25 : i32
    %74 = tpu.assume_multiple %73, 8 : i32
    %75 = arith.index_cast %74 : i32 to index
    %c0_26 = arith.constant 0 : index
    %76 = vector.load %arg9[%75, %c0_26] : memref<64x128xf32, #tpu.memory_space<vmem>>, vector<8x128xf32>
    %cst_27 = arith.constant dense<0.000000e+00> : vector<8x128xf32>
    %77 = tpu.matmul %70, %15, %cst_27 {dimension_numbers = #tpu.dot_dimension_numbers<[1], [0], [0], [1], [0, 0, 1, 1], [], []>} : vector<8x32xf32>, vector<32x128xf32>, vector<8x128xf32> -> vector<8x128xf32>
    %78 = arith.addf %76, %77 : vector<8x128xf32>
    %79 = math.tanh %78 : vector<8x128xf32>
    %80 = arith.negf %78 : vector<8x128xf32>
    %81 = math.exp %80 : vector<8x128xf32>
    %cst_28 = arith.constant 1.000000e+00 : f32
    %82 = vector.broadcast %cst_28 : f32 to vector<8x128xf32>
    %83 = arith.addf %82, %81 : vector<8x128xf32>
    %84 = arith.divf %82, %83 : vector<8x128xf32>
    %85 = arith.select %13, %79, %84 : vector<8x128xi1>, vector<8x128xf32>
    %86 = vector.extract_strided_slice %85 {offsets = [0, 0], sizes = [8, 32], strides = [1, 1]} : vector<8x128xf32> to vector<8x32xf32>
    %87 = vector.extract_strided_slice %85 {offsets = [0, 32], sizes = [8, 32], strides = [1, 1]} : vector<8x128xf32> to vector<8x32xf32>
    %88 = vector.extract_strided_slice %85 {offsets = [0, 64], sizes = [8, 32], strides = [1, 1]} : vector<8x128xf32> to vector<8x32xf32>
    %89 = vector.extract_strided_slice %85 {offsets = [0, 96], sizes = [8, 32], strides = [1, 1]} : vector<8x128xf32> to vector<8x32xf32>
    %90 = arith.mulf %87, %68 : vector<8x32xf32>
    %91 = arith.mulf %86, %88 : vector<8x32xf32>
    %92 = arith.addf %90, %91 : vector<8x32xf32>
    %93 = math.tanh %92 : vector<8x32xf32>
    %94 = arith.mulf %89, %93 : vector<8x32xf32>
    %95 = arith.index_cast %74 : i32 to index
    %c0_29 = arith.constant 0 : index
    %96 = vector.load %arg8[%95, %c0_29] : memref<64x32xf32, #tpu.memory_space<vmem>>, vector<8x32xf32>
    tpu.vector_store %arg8[%95, %c0_29], %94 {strides = array<i32>} : memref<64x32xf32, #tpu.memory_space<vmem>>, vector<8x32xf32>,
    %c3_i32 = arith.constant 3 : i32
    %c8_i32_30 = arith.constant 8 : i32
    %97 = arith.muli %c3_i32, %c8_i32_30 : i32
    %98 = tpu.assume_multiple %97, 8 : i32
    %99 = arith.index_cast %98 : i32 to index
    %c0_31 = arith.constant 0 : index
    %100 = vector.load %arg9[%99, %c0_31] : memref<64x128xf32, #tpu.memory_space<vmem>>, vector<8x128xf32>
    %cst_32 = arith.constant dense<0.000000e+00> : vector<8x128xf32>
    %101 = tpu.matmul %94, %15, %cst_32 {dimension_numbers = #tpu.dot_dimension_numbers<[1], [0], [0], [1], [0, 0, 1, 1], [], []>} : vector<8x32xf32>, vector<32x128xf32>, vector<8x128xf32> -> vector<8x128xf32>
    %102 = arith.addf %100, %101 : vector<8x128xf32>
    %103 = math.tanh %102 : vector<8x128xf32>
    %104 = arith.negf %102 : vector<8x128xf32>
    %105 = math.exp %104 : vector<8x128xf32>
    %cst_33 = arith.constant 1.000000e+00 : f32
    %106 = vector.broadcast %cst_33 : f32 to vector<8x128xf32>
    %107 = arith.addf %106, %105 : vector<8x128xf32>
    %108 = arith.divf %106, %107 : vector<8x128xf32>
    %109 = arith.select %13, %103, %108 : vector<8x128xi1>, vector<8x128xf32>
    %110 = vector.extract_strided_slice %109 {offsets = [0, 0], sizes = [8, 32], strides = [1, 1]} : vector<8x128xf32> to vector<8x32xf32>
    %111 = vector.extract_strided_slice %109 {offsets = [0, 32], sizes = [8, 32], strides = [1, 1]} : vector<8x128xf32> to vector<8x32xf32>
    %112 = vector.extract_strided_slice %109 {offsets = [0, 64], sizes = [8, 32], strides = [1, 1]} : vector<8x128xf32> to vector<8x32xf32>
    %113 = vector.extract_strided_slice %109 {offsets = [0, 96], sizes = [8, 32], strides = [1, 1]} : vector<8x128xf32> to vector<8x32xf32>
    %114 = arith.mulf %111, %92 : vector<8x32xf32>
    %115 = arith.mulf %110, %112 : vector<8x32xf32>
    %116 = arith.addf %114, %115 : vector<8x32xf32>
    %117 = math.tanh %116 : vector<8x32xf32>
    %118 = arith.mulf %113, %117 : vector<8x32xf32>
    %119 = arith.index_cast %98 : i32 to index
    %c0_34 = arith.constant 0 : index
    %120 = vector.load %arg8[%119, %c0_34] : memref<64x32xf32, #tpu.memory_space<vmem>>, vector<8x32xf32>
    tpu.vector_store %arg8[%119, %c0_34], %118 {strides = array<i32>} : memref<64x32xf32, #tpu.memory_space<vmem>>, vector<8x32xf32>,
    %c4_i32 = arith.constant 4 : i32
    %c8_i32_35 = arith.constant 8 : i32
    %121 = arith.muli %c4_i32, %c8_i32_35 : i32
    %122 = tpu.assume_multiple %121, 8 : i32
    %123 = arith.index_cast %122 : i32 to index
    %c0_36 = arith.constant 0 : index
    %124 = vector.load %arg9[%123, %c0_36] : memref<64x128xf32, #tpu.memory_space<vmem>>, vector<8x128xf32>
    %cst_37 = arith.constant dense<0.000000e+00> : vector<8x128xf32>
    %125 = tpu.matmul %118, %15, %cst_37 {dimension_numbers = #tpu.dot_dimension_numbers<[1], [0], [0], [1], [0, 0, 1, 1], [], []>} : vector<8x32xf32>, vector<32x128xf32>, vector<8x128xf32> -> vector<8x128xf32>
    %126 = arith.addf %124, %125 : vector<8x128xf32>
    %127 = math.tanh %126 : vector<8x128xf32>
    %128 = arith.negf %126 : vector<8x128xf32>
    %129 = math.exp %128 : vector<8x128xf32>
    %cst_38 = arith.constant 1.000000e+00 : f32
    %130 = vector.broadcast %cst_38 : f32 to vector<8x128xf32>
    %131 = arith.addf %130, %129 : vector<8x128xf32>
    %132 = arith.divf %130, %131 : vector<8x128xf32>
    %133 = arith.select %13, %127, %132 : vector<8x128xi1>, vector<8x128xf32>
    %134 = vector.extract_strided_slice %133 {offsets = [0, 0], sizes = [8, 32], strides = [1, 1]} : vector<8x128xf32> to vector<8x32xf32>
    %135 = vector.extract_strided_slice %133 {offsets = [0, 32], sizes = [8, 32], strides = [1, 1]} : vector<8x128xf32> to vector<8x32xf32>
    %136 = vector.extract_strided_slice %133 {offsets = [0, 64], sizes = [8, 32], strides = [1, 1]} : vector<8x128xf32> to vector<8x32xf32>
    %137 = vector.extract_strided_slice %133 {offsets = [0, 96], sizes = [8, 32], strides = [1, 1]} : vector<8x128xf32> to vector<8x32xf32>
    %138 = arith.mulf %135, %116 : vector<8x32xf32>
    %139 = arith.mulf %134, %136 : vector<8x32xf32>
    %140 = arith.addf %138, %139 : vector<8x32xf32>
    %141 = math.tanh %140 : vector<8x32xf32>
    %142 = arith.mulf %137, %141 : vector<8x32xf32>
    %143 = arith.index_cast %122 : i32 to index
    %c0_39 = arith.constant 0 : index
    %144 = vector.load %arg8[%143, %c0_39] : memref<64x32xf32, #tpu.memory_space<vmem>>, vector<8x32xf32>
    tpu.vector_store %arg8[%143, %c0_39], %142 {strides = array<i32>} : memref<64x32xf32, #tpu.memory_space<vmem>>, vector<8x32xf32>,
    %c5_i32 = arith.constant 5 : i32
    %c8_i32_40 = arith.constant 8 : i32
    %145 = arith.muli %c5_i32, %c8_i32_40 : i32
    %146 = tpu.assume_multiple %145, 8 : i32
    %147 = arith.index_cast %146 : i32 to index
    %c0_41 = arith.constant 0 : index
    %148 = vector.load %arg9[%147, %c0_41] : memref<64x128xf32, #tpu.memory_space<vmem>>, vector<8x128xf32>
    %cst_42 = arith.constant dense<0.000000e+00> : vector<8x128xf32>
    %149 = tpu.matmul %142, %15, %cst_42 {dimension_numbers = #tpu.dot_dimension_numbers<[1], [0], [0], [1], [0, 0, 1, 1], [], []>} : vector<8x32xf32>, vector<32x128xf32>, vector<8x128xf32> -> vector<8x128xf32>
    %150 = arith.addf %148, %149 : vector<8x128xf32>
    %151 = math.tanh %150 : vector<8x128xf32>
    %152 = arith.negf %150 : vector<8x128xf32>
    %153 = math.exp %152 : vector<8x128xf32>
    %cst_43 = arith.constant 1.000000e+00 : f32
    %154 = vector.broadcast %cst_43 : f32 to vector<8x128xf32>
    %155 = arith.addf %154, %153 : vector<8x128xf32>
    %156 = arith.divf %154, %155 : vector<8x128xf32>
    %157 = arith.select %13, %151, %156 : vector<8x128xi1>, vector<8x128xf32>
    %158 = vector.extract_strided_slice %157 {offsets = [0, 0], sizes = [8, 32], strides = [1, 1]} : vector<8x128xf32> to vector<8x32xf32>
    %159 = vector.extract_strided_slice %157 {offsets = [0, 32], sizes = [8, 32], strides = [1, 1]} : vector<8x128xf32> to vector<8x32xf32>
    %160 = vector.extract_strided_slice %157 {offsets = [0, 64], sizes = [8, 32], strides = [1, 1]} : vector<8x128xf32> to vector<8x32xf32>
    %161 = vector.extract_strided_slice %157 {offsets = [0, 96], sizes = [8, 32], strides = [1, 1]} : vector<8x128xf32> to vector<8x32xf32>
    %162 = arith.mulf %159, %140 : vector<8x32xf32>
    %163 = arith.mulf %158, %160 : vector<8x32xf32>
    %164 = arith.addf %162, %163 : vector<8x32xf32>
    %165 = math.tanh %164 : vector<8x32xf32>
    %166 = arith.mulf %161, %165 : vector<8x32xf32>
    %167 = arith.index_cast %146 : i32 to index
    %c0_44 = arith.constant 0 : index
    %168 = vector.load %arg8[%167, %c0_44] : memref<64x32xf32, #tpu.memory_space<vmem>>, vector<8x32xf32>
    tpu.vector_store %arg8[%167, %c0_44], %166 {strides = array<i32>} : memref<64x32xf32, #tpu.memory_space<vmem>>, vector<8x32xf32>,
    %c6_i32 = arith.constant 6 : i32
    %c8_i32_45 = arith.constant 8 : i32
    %169 = arith.muli %c6_i32, %c8_i32_45 : i32
    %170 = tpu.assume_multiple %169, 8 : i32
    %171 = arith.index_cast %170 : i32 to index
    %c0_46 = arith.constant 0 : index
    %172 = vector.load %arg9[%171, %c0_46] : memref<64x128xf32, #tpu.memory_space<vmem>>, vector<8x128xf32>
    %cst_47 = arith.constant dense<0.000000e+00> : vector<8x128xf32>
    %173 = tpu.matmul %166, %15, %cst_47 {dimension_numbers = #tpu.dot_dimension_numbers<[1], [0], [0], [1], [0, 0, 1, 1], [], []>} : vector<8x32xf32>, vector<32x128xf32>, vector<8x128xf32> -> vector<8x128xf32>
    %174 = arith.addf %172, %173 : vector<8x128xf32>
    %175 = math.tanh %174 : vector<8x128xf32>
    %176 = arith.negf %174 : vector<8x128xf32>
    %177 = math.exp %176 : vector<8x128xf32>
    %cst_48 = arith.constant 1.000000e+00 : f32
    %178 = vector.broadcast %cst_48 : f32 to vector<8x128xf32>
    %179 = arith.addf %178, %177 : vector<8x128xf32>
    %180 = arith.divf %178, %179 : vector<8x128xf32>
    %181 = arith.select %13, %175, %180 : vector<8x128xi1>, vector<8x128xf32>
    %182 = vector.extract_strided_slice %181 {offsets = [0, 0], sizes = [8, 32], strides = [1, 1]} : vector<8x128xf32> to vector<8x32xf32>
    %183 = vector.extract_strided_slice %181 {offsets = [0, 32], sizes = [8, 32], strides = [1, 1]} : vector<8x128xf32> to vector<8x32xf32>
    %184 = vector.extract_strided_slice %181 {offsets = [0, 64], sizes = [8, 32], strides = [1, 1]} : vector<8x128xf32> to vector<8x32xf32>
    %185 = vector.extract_strided_slice %181 {offsets = [0, 96], sizes = [8, 32], strides = [1, 1]} : vector<8x128xf32> to vector<8x32xf32>
    %186 = arith.mulf %183, %164 : vector<8x32xf32>
    %187 = arith.mulf %182, %184 : vector<8x32xf32>
    %188 = arith.addf %186, %187 : vector<8x32xf32>
    %189 = math.tanh %188 : vector<8x32xf32>
    %190 = arith.mulf %185, %189 : vector<8x32xf32>
    %191 = arith.index_cast %170 : i32 to index
    %c0_49 = arith.constant 0 : index
    %192 = vector.load %arg8[%191, %c0_49] : memref<64x32xf32, #tpu.memory_space<vmem>>, vector<8x32xf32>
    tpu.vector_store %arg8[%191, %c0_49], %190 {strides = array<i32>} : memref<64x32xf32, #tpu.memory_space<vmem>>, vector<8x32xf32>,
    %c7_i32 = arith.constant 7 : i32
    %c8_i32_50 = arith.constant 8 : i32
    %193 = arith.muli %c7_i32, %c8_i32_50 : i32
    %194 = tpu.assume_multiple %193, 8 : i32
    %195 = arith.index_cast %194 : i32 to index
    %c0_51 = arith.constant 0 : index
    %196 = vector.load %arg9[%195, %c0_51] : memref<64x128xf32, #tpu.memory_space<vmem>>, vector<8x128xf32>
    %cst_52 = arith.constant dense<0.000000e+00> : vector<8x128xf32>
    %197 = tpu.matmul %190, %15, %cst_52 {dimension_numbers = #tpu.dot_dimension_numbers<[1], [0], [0], [1], [0, 0, 1, 1], [], []>} : vector<8x32xf32>, vector<32x128xf32>, vector<8x128xf32> -> vector<8x128xf32>
    %198 = arith.addf %196, %197 : vector<8x128xf32>
    %199 = math.tanh %198 : vector<8x128xf32>
    %200 = arith.negf %198 : vector<8x128xf32>
    %201 = math.exp %200 : vector<8x128xf32>
    %cst_53 = arith.constant 1.000000e+00 : f32
    %202 = vector.broadcast %cst_53 : f32 to vector<8x128xf32>
    %203 = arith.addf %202, %201 : vector<8x128xf32>
    %204 = arith.divf %202, %203 : vector<8x128xf32>
    %205 = arith.select %13, %199, %204 : vector<8x128xi1>, vector<8x128xf32>
    %206 = vector.extract_strided_slice %205 {offsets = [0, 0], sizes = [8, 32], strides = [1, 1]} : vector<8x128xf32> to vector<8x32xf32>
    %207 = vector.extract_strided_slice %205 {offsets = [0, 32], sizes = [8, 32], strides = [1, 1]} : vector<8x128xf32> to vector<8x32xf32>
    %208 = vector.extract_strided_slice %205 {offsets = [0, 64], sizes = [8, 32], strides = [1, 1]} : vector<8x128xf32> to vector<8x32xf32>
    %209 = vector.extract_strided_slice %205 {offsets = [0, 96], sizes = [8, 32], strides = [1, 1]} : vector<8x128xf32> to vector<8x32xf32>
    %210 = arith.mulf %207, %188 : vector<8x32xf32>
    %211 = arith.mulf %206, %208 : vector<8x32xf32>
    %212 = arith.addf %210, %211 : vector<8x32xf32>
    %213 = math.tanh %212 : vector<8x32xf32>
    %214 = arith.mulf %209, %213 : vector<8x32xf32>
    %215 = arith.index_cast %194 : i32 to index
    %c0_54 = arith.constant 0 : index
    %216 = vector.load %arg8[%215, %c0_54] : memref<64x32xf32, #tpu.memory_space<vmem>>, vector<8x32xf32>
    tpu.vector_store %arg8[%215, %c0_54], %214 {strides = array<i32>} : memref<64x32xf32, #tpu.memory_space<vmem>>, vector<8x32xf32>,
    %c8_i32_55 = arith.constant 8 : i32
    %c1 = arith.constant 1 : index
    %c0_56 = arith.constant 0 : index
    %c0_57 = arith.constant 0 : index
    %217 = vector.load %arg3[%c1, %c0_56, %c0_57] : memref<2x32x128xf32, #tpu.memory_space<vmem>>, vector<1x32x128xf32>
    %218 = vector.shape_cast %217 : vector<1x32x128xf32> to vector<32x128xf32>
    %c1_58 = arith.constant 1 : index
    %c0_59 = arith.constant 0 : index
    %c0_60 = arith.constant 0 : index
    %219 = vector.load %arg4[%c1_58, %c0_59, %c0_60] : memref<2x1x128xf32, #tpu.memory_space<vmem>>, vector<1x1x128xf32>
    %220 = vector.shape_cast %219 : vector<1x1x128xf32> to vector<1x128xf32>
    %c0_61 = arith.constant 0 : index
    %c0_62 = arith.constant 0 : index
    %221 = vector.load %arg8[%c0_61, %c0_62] : memref<64x32xf32, #tpu.memory_space<vmem>>, vector<64x32xf32>
    %c1_63 = arith.constant 1 : index
    %c0_64 = arith.constant 0 : index
    %c0_65 = arith.constant 0 : index
    %222 = vector.load %arg2[%c1_63, %c0_64, %c0_65] : memref<2x32x128xf32, #tpu.memory_space<vmem>>, vector<1x32x128xf32>
    %223 = vector.shape_cast %222 : vector<1x32x128xf32> to vector<32x128xf32>
    %cst_66 = arith.constant dense<0.000000e+00> : vector<64x128xf32>
    %224 = tpu.matmul %221, %223, %cst_66 {dimension_numbers = #tpu.dot_dimension_numbers<[1], [0], [0], [1], [0, 0, 1, 1], [], []>} : vector<64x32xf32>, vector<32x128xf32>, vector<64x128xf32> -> vector<64x128xf32>
    %225 = vector.broadcast %220 : vector<1x128xf32> to vector<64x128xf32>
    %226 = arith.addf %224, %225 : vector<64x128xf32>
    %c0_67 = arith.constant 0 : index
    %c0_68 = arith.constant 0 : index
    %227 = vector.load %arg9[%c0_67, %c0_68] : memref<64x128xf32, #tpu.memory_space<vmem>>, vector<64x128xf32>
    tpu.vector_store %arg9[%c0_67, %c0_68], %226 {strides = array<i32>} : memref<64x128xf32, #tpu.memory_space<vmem>>, vector<64x128xf32>,
    %cst_69 = arith.constant 0.000000e+00 : f32
    %228 = vector.broadcast %cst_69 : f32 to vector<8x32xf32>
    %c0_i32_70 = arith.constant 0 : i32
    %c8_i32_71 = arith.constant 8 : i32
    %229 = arith.muli %c0_i32_70, %c8_i32_71 : i32
    %230 = tpu.assume_multiple %229, 8 : i32
    %231 = arith.index_cast %230 : i32 to index
    %c0_72 = arith.constant 0 : index
    %232 = vector.load %arg9[%231, %c0_72] : memref<64x128xf32, #tpu.memory_space<vmem>>, vector<8x128xf32>
    %cst_73 = arith.constant dense<0.000000e+00> : vector<8x128xf32>
    %233 = tpu.matmul %228, %218, %cst_73 {dimension_numbers = #tpu.dot_dimension_numbers<[1], [0], [0], [1], [0, 0, 1, 1], [], []>} : vector<8x32xf32>, vector<32x128xf32>, vector<8x128xf32> -> vector<8x128xf32>
    %234 = arith.addf %232, %233 : vector<8x128xf32>
    %235 = math.tanh %234 : vector<8x128xf32>
    %236 = arith.negf %234 : vector<8x128xf32>
    %237 = math.exp %236 : vector<8x128xf32>
    %cst_74 = arith.constant 1.000000e+00 : f32
    %238 = vector.broadcast %cst_74 : f32 to vector<8x128xf32>
    %239 = arith.addf %238, %237 : vector<8x128xf32>
    %240 = arith.divf %238, %239 : vector<8x128xf32>
    %241 = arith.select %13, %235, %240 : vector<8x128xi1>, vector<8x128xf32>
    %242 = vector.extract_strided_slice %241 {offsets = [0, 0], sizes = [8, 32], strides = [1, 1]} : vector<8x128xf32> to vector<8x32xf32>
    %243 = vector.extract_strided_slice %241 {offsets = [0, 32], sizes = [8, 32], strides = [1, 1]} : vector<8x128xf32> to vector<8x32xf32>
    %244 = vector.extract_strided_slice %241 {offsets = [0, 64], sizes = [8, 32], strides = [1, 1]} : vector<8x128xf32> to vector<8x32xf32>
    %245 = vector.extract_strided_slice %241 {offsets = [0, 96], sizes = [8, 32], strides = [1, 1]} : vector<8x128xf32> to vector<8x32xf32>
    %246 = arith.mulf %243, %228 : vector<8x32xf32>
    %247 = arith.mulf %242, %244 : vector<8x32xf32>
    %248 = arith.addf %246, %247 : vector<8x32xf32>
    %249 = math.tanh %248 : vector<8x32xf32>
    %250 = arith.mulf %245, %249 : vector<8x32xf32>
    %251 = arith.index_cast %230 : i32 to index
    %c0_75 = arith.constant 0 : index
    %252 = vector.load %arg8[%251, %c0_75] : memref<64x32xf32, #tpu.memory_space<vmem>>, vector<8x32xf32>
    tpu.vector_store %arg8[%251, %c0_75], %250 {strides = array<i32>} : memref<64x32xf32, #tpu.memory_space<vmem>>, vector<8x32xf32>,
    %c1_i32_76 = arith.constant 1 : i32
    %c8_i32_77 = arith.constant 8 : i32
    %253 = arith.muli %c1_i32_76, %c8_i32_77 : i32
    %254 = tpu.assume_multiple %253, 8 : i32
    %255 = arith.index_cast %254 : i32 to index
    %c0_78 = arith.constant 0 : index
    %256 = vector.load %arg9[%255, %c0_78] : memref<64x128xf32, #tpu.memory_space<vmem>>, vector<8x128xf32>
    %cst_79 = arith.constant dense<0.000000e+00> : vector<8x128xf32>
    %257 = tpu.matmul %250, %218, %cst_79 {dimension_numbers = #tpu.dot_dimension_numbers<[1], [0], [0], [1], [0, 0, 1, 1], [], []>} : vector<8x32xf32>, vector<32x128xf32>, vector<8x128xf32> -> vector<8x128xf32>
    %258 = arith.addf %256, %257 : vector<8x128xf32>
    %259 = math.tanh %258 : vector<8x128xf32>
    %260 = arith.negf %258 : vector<8x128xf32>
    %261 = math.exp %260 : vector<8x128xf32>
    %cst_80 = arith.constant 1.000000e+00 : f32
    %262 = vector.broadcast %cst_80 : f32 to vector<8x128xf32>
    %263 = arith.addf %262, %261 : vector<8x128xf32>
    %264 = arith.divf %262, %263 : vector<8x128xf32>
    %265 = arith.select %13, %259, %264 : vector<8x128xi1>, vector<8x128xf32>
    %266 = vector.extract_strided_slice %265 {offsets = [0, 0], sizes = [8, 32], strides = [1, 1]} : vector<8x128xf32> to vector<8x32xf32>
    %267 = vector.extract_strided_slice %265 {offsets = [0, 32], sizes = [8, 32], strides = [1, 1]} : vector<8x128xf32> to vector<8x32xf32>
    %268 = vector.extract_strided_slice %265 {offsets = [0, 64], sizes = [8, 32], strides = [1, 1]} : vector<8x128xf32> to vector<8x32xf32>
    %269 = vector.extract_strided_slice %265 {offsets = [0, 96], sizes = [8, 32], strides = [1, 1]} : vector<8x128xf32> to vector<8x32xf32>
    %270 = arith.mulf %267, %248 : vector<8x32xf32>
    %271 = arith.mulf %266, %268 : vector<8x32xf32>
    %272 = arith.addf %270, %271 : vector<8x32xf32>
    %273 = math.tanh %272 : vector<8x32xf32>
    %274 = arith.mulf %269, %273 : vector<8x32xf32>
    %275 = arith.index_cast %254 : i32 to index
    %c0_81 = arith.constant 0 : index
    %276 = vector.load %arg8[%275, %c0_81] : memref<64x32xf32, #tpu.memory_space<vmem>>, vector<8x32xf32>
    tpu.vector_store %arg8[%275, %c0_81], %274 {strides = array<i32>} : memref<64x32xf32, #tpu.memory_space<vmem>>, vector<8x32xf32>,
    %c2_i32_82 = arith.constant 2 : i32
    %c8_i32_83 = arith.constant 8 : i32
    %277 = arith.muli %c2_i32_82, %c8_i32_83 : i32
    %278 = tpu.assume_multiple %277, 8 : i32
    %279 = arith.index_cast %278 : i32 to index
    %c0_84 = arith.constant 0 : index
    %280 = vector.load %arg9[%279, %c0_84] : memref<64x128xf32, #tpu.memory_space<vmem>>, vector<8x128xf32>
    %cst_85 = arith.constant dense<0.000000e+00> : vector<8x128xf32>
    %281 = tpu.matmul %274, %218, %cst_85 {dimension_numbers = #tpu.dot_dimension_numbers<[1], [0], [0], [1], [0, 0, 1, 1], [], []>} : vector<8x32xf32>, vector<32x128xf32>, vector<8x128xf32> -> vector<8x128xf32>
    %282 = arith.addf %280, %281 : vector<8x128xf32>
    %283 = math.tanh %282 : vector<8x128xf32>
    %284 = arith.negf %282 : vector<8x128xf32>
    %285 = math.exp %284 : vector<8x128xf32>
    %cst_86 = arith.constant 1.000000e+00 : f32
    %286 = vector.broadcast %cst_86 : f32 to vector<8x128xf32>
    %287 = arith.addf %286, %285 : vector<8x128xf32>
    %288 = arith.divf %286, %287 : vector<8x128xf32>
    %289 = arith.select %13, %283, %288 : vector<8x128xi1>, vector<8x128xf32>
    %290 = vector.extract_strided_slice %289 {offsets = [0, 0], sizes = [8, 32], strides = [1, 1]} : vector<8x128xf32> to vector<8x32xf32>
    %291 = vector.extract_strided_slice %289 {offsets = [0, 32], sizes = [8, 32], strides = [1, 1]} : vector<8x128xf32> to vector<8x32xf32>
    %292 = vector.extract_strided_slice %289 {offsets = [0, 64], sizes = [8, 32], strides = [1, 1]} : vector<8x128xf32> to vector<8x32xf32>
    %293 = vector.extract_strided_slice %289 {offsets = [0, 96], sizes = [8, 32], strides = [1, 1]} : vector<8x128xf32> to vector<8x32xf32>
    %294 = arith.mulf %291, %272 : vector<8x32xf32>
    %295 = arith.mulf %290, %292 : vector<8x32xf32>
    %296 = arith.addf %294, %295 : vector<8x32xf32>
    %297 = math.tanh %296 : vector<8x32xf32>
    %298 = arith.mulf %293, %297 : vector<8x32xf32>
    %299 = arith.index_cast %278 : i32 to index
    %c0_87 = arith.constant 0 : index
    %300 = vector.load %arg8[%299, %c0_87] : memref<64x32xf32, #tpu.memory_space<vmem>>, vector<8x32xf32>
    tpu.vector_store %arg8[%299, %c0_87], %298 {strides = array<i32>} : memref<64x32xf32, #tpu.memory_space<vmem>>, vector<8x32xf32>,
    %c3_i32_88 = arith.constant 3 : i32
    %c8_i32_89 = arith.constant 8 : i32
    %301 = arith.muli %c3_i32_88, %c8_i32_89 : i32
    %302 = tpu.assume_multiple %301, 8 : i32
    %303 = arith.index_cast %302 : i32 to index
    %c0_90 = arith.constant 0 : index
    %304 = vector.load %arg9[%303, %c0_90] : memref<64x128xf32, #tpu.memory_space<vmem>>, vector<8x128xf32>
    %cst_91 = arith.constant dense<0.000000e+00> : vector<8x128xf32>
    %305 = tpu.matmul %298, %218, %cst_91 {dimension_numbers = #tpu.dot_dimension_numbers<[1], [0], [0], [1], [0, 0, 1, 1], [], []>} : vector<8x32xf32>, vector<32x128xf32>, vector<8x128xf32> -> vector<8x128xf32>
    %306 = arith.addf %304, %305 : vector<8x128xf32>
    %307 = math.tanh %306 : vector<8x128xf32>
    %308 = arith.negf %306 : vector<8x128xf32>
    %309 = math.exp %308 : vector<8x128xf32>
    %cst_92 = arith.constant 1.000000e+00 : f32
    %310 = vector.broadcast %cst_92 : f32 to vector<8x128xf32>
    %311 = arith.addf %310, %309 : vector<8x128xf32>
    %312 = arith.divf %310, %311 : vector<8x128xf32>
    %313 = arith.select %13, %307, %312 : vector<8x128xi1>, vector<8x128xf32>
    %314 = vector.extract_strided_slice %313 {offsets = [0, 0], sizes = [8, 32], strides = [1, 1]} : vector<8x128xf32> to vector<8x32xf32>
    %315 = vector.extract_strided_slice %313 {offsets = [0, 32], sizes = [8, 32], strides = [1, 1]} : vector<8x128xf32> to vector<8x32xf32>
    %316 = vector.extract_strided_slice %313 {offsets = [0, 64], sizes = [8, 32], strides = [1, 1]} : vector<8x128xf32> to vector<8x32xf32>
    %317 = vector.extract_strided_slice %313 {offsets = [0, 96], sizes = [8, 32], strides = [1, 1]} : vector<8x128xf32> to vector<8x32xf32>
    %318 = arith.mulf %315, %296 : vector<8x32xf32>
    %319 = arith.mulf %314, %316 : vector<8x32xf32>
    %320 = arith.addf %318, %319 : vector<8x32xf32>
    %321 = math.tanh %320 : vector<8x32xf32>
    %322 = arith.mulf %317, %321 : vector<8x32xf32>
    %323 = arith.index_cast %302 : i32 to index
    %c0_93 = arith.constant 0 : index
    %324 = vector.load %arg8[%323, %c0_93] : memref<64x32xf32, #tpu.memory_space<vmem>>, vector<8x32xf32>
    tpu.vector_store %arg8[%323, %c0_93], %322 {strides = array<i32>} : memref<64x32xf32, #tpu.memory_space<vmem>>, vector<8x32xf32>,
    %c4_i32_94 = arith.constant 4 : i32
    %c8_i32_95 = arith.constant 8 : i32
    %325 = arith.muli %c4_i32_94, %c8_i32_95 : i32
    %326 = tpu.assume_multiple %325, 8 : i32
    %327 = arith.index_cast %326 : i32 to index
    %c0_96 = arith.constant 0 : index
    %328 = vector.load %arg9[%327, %c0_96] : memref<64x128xf32, #tpu.memory_space<vmem>>, vector<8x128xf32>
    %cst_97 = arith.constant dense<0.000000e+00> : vector<8x128xf32>
    %329 = tpu.matmul %322, %218, %cst_97 {dimension_numbers = #tpu.dot_dimension_numbers<[1], [0], [0], [1], [0, 0, 1, 1], [], []>} : vector<8x32xf32>, vector<32x128xf32>, vector<8x128xf32> -> vector<8x128xf32>
    %330 = arith.addf %328, %329 : vector<8x128xf32>
    %331 = math.tanh %330 : vector<8x128xf32>
    %332 = arith.negf %330 : vector<8x128xf32>
    %333 = math.exp %332 : vector<8x128xf32>
    %cst_98 = arith.constant 1.000000e+00 : f32
    %334 = vector.broadcast %cst_98 : f32 to vector<8x128xf32>
    %335 = arith.addf %334, %333 : vector<8x128xf32>
    %336 = arith.divf %334, %335 : vector<8x128xf32>
    %337 = arith.select %13, %331, %336 : vector<8x128xi1>, vector<8x128xf32>
    %338 = vector.extract_strided_slice %337 {offsets = [0, 0], sizes = [8, 32], strides = [1, 1]} : vector<8x128xf32> to vector<8x32xf32>
    %339 = vector.extract_strided_slice %337 {offsets = [0, 32], sizes = [8, 32], strides = [1, 1]} : vector<8x128xf32> to vector<8x32xf32>
    %340 = vector.extract_strided_slice %337 {offsets = [0, 64], sizes = [8, 32], strides = [1, 1]} : vector<8x128xf32> to vector<8x32xf32>
    %341 = vector.extract_strided_slice %337 {offsets = [0, 96], sizes = [8, 32], strides = [1, 1]} : vector<8x128xf32> to vector<8x32xf32>
    %342 = arith.mulf %339, %320 : vector<8x32xf32>
    %343 = arith.mulf %338, %340 : vector<8x32xf32>
    %344 = arith.addf %342, %343 : vector<8x32xf32>
    %345 = math.tanh %344 : vector<8x32xf32>
    %346 = arith.mulf %341, %345 : vector<8x32xf32>
    %347 = arith.index_cast %326 : i32 to index
    %c0_99 = arith.constant 0 : index
    %348 = vector.load %arg8[%347, %c0_99] : memref<64x32xf32, #tpu.memory_space<vmem>>, vector<8x32xf32>
    tpu.vector_store %arg8[%347, %c0_99], %346 {strides = array<i32>} : memref<64x32xf32, #tpu.memory_space<vmem>>, vector<8x32xf32>,
    %c5_i32_100 = arith.constant 5 : i32
    %c8_i32_101 = arith.constant 8 : i32
    %349 = arith.muli %c5_i32_100, %c8_i32_101 : i32
    %350 = tpu.assume_multiple %349, 8 : i32
    %351 = arith.index_cast %350 : i32 to index
    %c0_102 = arith.constant 0 : index
    %352 = vector.load %arg9[%351, %c0_102] : memref<64x128xf32, #tpu.memory_space<vmem>>, vector<8x128xf32>
    %cst_103 = arith.constant dense<0.000000e+00> : vector<8x128xf32>
    %353 = tpu.matmul %346, %218, %cst_103 {dimension_numbers = #tpu.dot_dimension_numbers<[1], [0], [0], [1], [0, 0, 1, 1], [], []>} : vector<8x32xf32>, vector<32x128xf32>, vector<8x128xf32> -> vector<8x128xf32>
    %354 = arith.addf %352, %353 : vector<8x128xf32>
    %355 = math.tanh %354 : vector<8x128xf32>
    %356 = arith.negf %354 : vector<8x128xf32>
    %357 = math.exp %356 : vector<8x128xf32>
    %cst_104 = arith.constant 1.000000e+00 : f32
    %358 = vector.broadcast %cst_104 : f32 to vector<8x128xf32>
    %359 = arith.addf %358, %357 : vector<8x128xf32>
    %360 = arith.divf %358, %359 : vector<8x128xf32>
    %361 = arith.select %13, %355, %360 : vector<8x128xi1>, vector<8x128xf32>
    %362 = vector.extract_strided_slice %361 {offsets = [0, 0], sizes = [8, 32], strides = [1, 1]} : vector<8x128xf32> to vector<8x32xf32>
    %363 = vector.extract_strided_slice %361 {offsets = [0, 32], sizes = [8, 32], strides = [1, 1]} : vector<8x128xf32> to vector<8x32xf32>
    %364 = vector.extract_strided_slice %361 {offsets = [0, 64], sizes = [8, 32], strides = [1, 1]} : vector<8x128xf32> to vector<8x32xf32>
    %365 = vector.extract_strided_slice %361 {offsets = [0, 96], sizes = [8, 32], strides = [1, 1]} : vector<8x128xf32> to vector<8x32xf32>
    %366 = arith.mulf %363, %344 : vector<8x32xf32>
    %367 = arith.mulf %362, %364 : vector<8x32xf32>
    %368 = arith.addf %366, %367 : vector<8x32xf32>
    %369 = math.tanh %368 : vector<8x32xf32>
    %370 = arith.mulf %365, %369 : vector<8x32xf32>
    %371 = arith.index_cast %350 : i32 to index
    %c0_105 = arith.constant 0 : index
    %372 = vector.load %arg8[%371, %c0_105] : memref<64x32xf32, #tpu.memory_space<vmem>>, vector<8x32xf32>
    tpu.vector_store %arg8[%371, %c0_105], %370 {strides = array<i32>} : memref<64x32xf32, #tpu.memory_space<vmem>>, vector<8x32xf32>,
    %c6_i32_106 = arith.constant 6 : i32
    %c8_i32_107 = arith.constant 8 : i32
    %373 = arith.muli %c6_i32_106, %c8_i32_107 : i32
    %374 = tpu.assume_multiple %373, 8 : i32
    %375 = arith.index_cast %374 : i32 to index
    %c0_108 = arith.constant 0 : index
    %376 = vector.load %arg9[%375, %c0_108] : memref<64x128xf32, #tpu.memory_space<vmem>>, vector<8x128xf32>
    %cst_109 = arith.constant dense<0.000000e+00> : vector<8x128xf32>
    %377 = tpu.matmul %370, %218, %cst_109 {dimension_numbers = #tpu.dot_dimension_numbers<[1], [0], [0], [1], [0, 0, 1, 1], [], []>} : vector<8x32xf32>, vector<32x128xf32>, vector<8x128xf32> -> vector<8x128xf32>
    %378 = arith.addf %376, %377 : vector<8x128xf32>
    %379 = math.tanh %378 : vector<8x128xf32>
    %380 = arith.negf %378 : vector<8x128xf32>
    %381 = math.exp %380 : vector<8x128xf32>
    %cst_110 = arith.constant 1.000000e+00 : f32
    %382 = vector.broadcast %cst_110 : f32 to vector<8x128xf32>
    %383 = arith.addf %382, %381 : vector<8x128xf32>
    %384 = arith.divf %382, %383 : vector<8x128xf32>
    %385 = arith.select %13, %379, %384 : vector<8x128xi1>, vector<8x128xf32>
    %386 = vector.extract_strided_slice %385 {offsets = [0, 0], sizes = [8, 32], strides = [1, 1]} : vector<8x128xf32> to vector<8x32xf32>
    %387 = vector.extract_strided_slice %385 {offsets = [0, 32], sizes = [8, 32], strides = [1, 1]} : vector<8x128xf32> to vector<8x32xf32>
    %388 = vector.extract_strided_slice %385 {offsets = [0, 64], sizes = [8, 32], strides = [1, 1]} : vector<8x128xf32> to vector<8x32xf32>
    %389 = vector.extract_strided_slice %385 {offsets = [0, 96], sizes = [8, 32], strides = [1, 1]} : vector<8x128xf32> to vector<8x32xf32>
    %390 = arith.mulf %387, %368 : vector<8x32xf32>
    %391 = arith.mulf %386, %388 : vector<8x32xf32>
    %392 = arith.addf %390, %391 : vector<8x32xf32>
    %393 = math.tanh %392 : vector<8x32xf32>
    %394 = arith.mulf %389, %393 : vector<8x32xf32>
    %395 = arith.index_cast %374 : i32 to index
    %c0_111 = arith.constant 0 : index
    %396 = vector.load %arg8[%395, %c0_111] : memref<64x32xf32, #tpu.memory_space<vmem>>, vector<8x32xf32>
    tpu.vector_store %arg8[%395, %c0_111], %394 {strides = array<i32>} : memref<64x32xf32, #tpu.memory_space<vmem>>, vector<8x32xf32>,
    %c7_i32_112 = arith.constant 7 : i32
    %c8_i32_113 = arith.constant 8 : i32
    %397 = arith.muli %c7_i32_112, %c8_i32_113 : i32
    %398 = tpu.assume_multiple %397, 8 : i32
    %399 = arith.index_cast %398 : i32 to index
    %c0_114 = arith.constant 0 : index
    %400 = vector.load %arg9[%399, %c0_114] : memref<64x128xf32, #tpu.memory_space<vmem>>, vector<8x128xf32>
    %cst_115 = arith.constant dense<0.000000e+00> : vector<8x128xf32>
    %401 = tpu.matmul %394, %218, %cst_115 {dimension_numbers = #tpu.dot_dimension_numbers<[1], [0], [0], [1], [0, 0, 1, 1], [], []>} : vector<8x32xf32>, vector<32x128xf32>, vector<8x128xf32> -> vector<8x128xf32>
    %402 = arith.addf %400, %401 : vector<8x128xf32>
    %403 = math.tanh %402 : vector<8x128xf32>
    %404 = arith.negf %402 : vector<8x128xf32>
    %405 = math.exp %404 : vector<8x128xf32>
    %cst_116 = arith.constant 1.000000e+00 : f32
    %406 = vector.broadcast %cst_116 : f32 to vector<8x128xf32>
    %407 = arith.addf %406, %405 : vector<8x128xf32>
    %408 = arith.divf %406, %407 : vector<8x128xf32>
    %409 = arith.select %13, %403, %408 : vector<8x128xi1>, vector<8x128xf32>
    %410 = vector.extract_strided_slice %409 {offsets = [0, 0], sizes = [8, 32], strides = [1, 1]} : vector<8x128xf32> to vector<8x32xf32>
    %411 = vector.extract_strided_slice %409 {offsets = [0, 32], sizes = [8, 32], strides = [1, 1]} : vector<8x128xf32> to vector<8x32xf32>
    %412 = vector.extract_strided_slice %409 {offsets = [0, 64], sizes = [8, 32], strides = [1, 1]} : vector<8x128xf32> to vector<8x32xf32>
    %413 = vector.extract_strided_slice %409 {offsets = [0, 96], sizes = [8, 32], strides = [1, 1]} : vector<8x128xf32> to vector<8x32xf32>
    %414 = arith.mulf %411, %392 : vector<8x32xf32>
    %415 = arith.mulf %410, %412 : vector<8x32xf32>
    %416 = arith.addf %414, %415 : vector<8x32xf32>
    %417 = math.tanh %416 : vector<8x32xf32>
    %418 = arith.mulf %413, %417 : vector<8x32xf32>
    %419 = arith.index_cast %398 : i32 to index
    %c0_117 = arith.constant 0 : index
    %420 = vector.load %arg8[%419, %c0_117] : memref<64x32xf32, #tpu.memory_space<vmem>>, vector<8x32xf32>
    tpu.vector_store %arg8[%419, %c0_117], %418 {strides = array<i32>} : memref<64x32xf32, #tpu.memory_space<vmem>>, vector<8x32xf32>,
    %c8_i32_118 = arith.constant 8 : i32
    %c0_119 = arith.constant 0 : index
    %c0_120 = arith.constant 0 : index
    %421 = vector.load %arg8[%c0_119, %c0_120] : memref<64x32xf32, #tpu.memory_space<vmem>>, vector<64x32xf32>
    %c0_121 = arith.constant 0 : index
    %c0_122 = arith.constant 0 : index
    %422 = vector.load %arg5[%c0_121, %c0_122] : memref<32x128xf32, #tpu.memory_space<vmem>>, vector<32x128xf32>
    %cst_123 = arith.constant dense<0.000000e+00> : vector<64x128xf32>
    %423 = tpu.matmul %421, %422, %cst_123 {dimension_numbers = #tpu.dot_dimension_numbers<[1], [0], [0], [1], [0, 0, 1, 1], [], []>} : vector<64x32xf32>, vector<32x128xf32>, vector<64x128xf32> -> vector<64x128xf32>
    %c0_124 = arith.constant 0 : index
    %c0_125 = arith.constant 0 : index
    %424 = vector.load %arg6[%c0_124, %c0_125] : memref<1x128xf32, #tpu.memory_space<vmem>>, vector<1x128xf32>
    %425 = vector.broadcast %424 : vector<1x128xf32> to vector<64x128xf32>
    %426 = arith.addf %423, %425 : vector<64x128xf32>
    %c0_126 = arith.constant 0 : index
    %c0_127 = arith.constant 0 : index
    %427 = vector.load %arg7[%c0_126, %c0_127] : memref<64x128xf32, #tpu.memory_space<vmem>>, vector<64x128xf32>
    tpu.vector_store %arg7[%c0_126, %c0_127], %426 {strides = array<i32>} : memref<64x128xf32, #tpu.memory_space<vmem>>, vector<64x128xf32>,
    return
  }
}

</mosaic_0001>

<llo_original>
// kernel: forward.1
$region0: #{forward.1}
  #allocation0 [shape = 'u32[]', space=smem, size = 0x4, offset = 0x4, fixed_abs, tag = 'smem constant byte address 0x4 - core index']
  #allocation1 [shape = 'u32[72,128]{1,0:T(1,128)}', space=vmem, size = 0x9000, scoped, tag = 'internal scratch']
  #allocation2 [shape = 'f32[64,32]{1,0:T(8,128)}', space=vmem, size = 0x8000, scoped, tag = 'scratch operand']
  #allocation3 [shape = 'f32[64,128]{1,0:T(8,128)}', space=vmem, size = 0x8000, scoped, tag = 'scratch operand']
  %s0 = inlined_call_operand.vmem [shape: s32[64,1], index: 0, kind: input, shape index: {}]
  %s1 = inlined_call_operand.vmem [shape: f32[32,32], index: 1, kind: input, shape index: {}]
  %s2 = inlined_call_operand.vmem [shape: f32[2,32,128], index: 2, kind: input, shape index: {}]
  %s3 = inlined_call_operand.hbm [shape: f32[2,32,128], index: 3, kind: input, shape index: {}]
  %s4 = inlined_call_operand.vmem [shape: f32[2,1,128], index: 4, kind: input, shape index: {}]
  %s5 = inlined_call_operand.hbm [shape: f32[32,128], index: 5, kind: input, shape index: {}]
  %s6 = inlined_call_operand.vmem [shape: f32[1,128], index: 6, kind: input, shape index: {}]
  %s7 = inlined_call_operand.vmem [shape: f32[64,128], index: 7, kind: output, shape index: {}]
  %s8 = sld [smem:[#allocation0]]
  $region46: #{forward.1} parent=0
    _
  %s10 = ssub.s32 1, %s8
  %s11 = scalar_select 0, %s10, %s8
  $region1: #{forward.1} parent=0
    #allocation4 [shape = 'u8[32768]{0}', space=vmem, size = 0x8000, scoped, tag = 'input window, operand 3, single buffered']
    #allocation5 [shape = 's32[1]{0}', space=sflag, size = 0x4, scoped, tag = 'scoped memory for forward.1']
    #allocation6 [shape = 'u8[16384]{0}', space=vmem, size = 0x4000, scoped, tag = 'input window, operand 5, single buffered']
    #allocation7 [shape = 's32[1]{0}', space=sflag, size = 0x4, scoped, tag = 'scoped memory for forward.1']
    %12 = vsyncpa [#allocation5], 0
    %13 = vsyncpa [#allocation7], 0
    // Predicated region
    $region2: #{forward.1} parent=1 // pred_check
      _
    $region3: #{forward.1} parent=1 // pred_check_branch
      %15 = sbr.rel (0) target = $region5
    $region4: #{forward.1} parent=1 // pred_region
      _
    $region5: #{forward.1} parent=1 // pred_fallthru
      _
    // Predicated region
    $region6: #{forward.1} parent=1 // pred_check
      _
    $region7: #{forward.1} parent=1 // pred_check_branch
      %17 = sbr.rel (0) target = $region9
    $region8: #{forward.1} parent=1 // pred_region
      _
    $region9: #{forward.1} parent=1 // pred_fallthru
      _
    // Predicated region
    $region10: #{forward.1} parent=1 // pred_check
      _
    $region11: #{forward.1} parent=1 // pred_check_branch
      %19 = sbr.rel (0) target = $region13
    $region12: #{forward.1} parent=1 // pred_region
      _
    $region13: #{forward.1} parent=1 // pred_fallthru
      _
    // Predicated region
    $region14: #{forward.1} parent=1 // pred_check
      _
    $region15: #{forward.1} parent=1 // pred_check_branch
      %21 = sbr.rel (0) target = $region17
    $region16: #{forward.1} parent=1 // pred_region
      %23 = vsyncadd [#allocation5], 0
      %s24 = sshll.u32 %s3, 4
      %s25 = int_to_ptr.hbm [resolvable:$true] %s24
      %s26 = sshll.u32 [#allocation4], 4
      %s27 = int_to_ptr.vmem [resolvable:$true] %s26
      %32 = dma.hbm_to_vmem [thread:$0]  %s25, 1024, %s27, [#allocation5], 128, 128, 8
    $region17: #{forward.1} parent=1 // pred_fallthru
      _
    // Predicated region
    $region18: #{forward.1} parent=1 // pred_check
      _
    $region19: #{forward.1} parent=1 // pred_check_branch
      %34 = sbr.rel (0) target = $region21
    $region20: #{forward.1} parent=1 // pred_region
      _
    $region21: #{forward.1} parent=1 // pred_fallthru
      _
    // Predicated region
    $region22: #{forward.1} parent=1 // pred_check
      _
    $region23: #{forward.1} parent=1 // pred_check_branch
      %36 = sbr.rel (0) target = $region25
    $region24: #{forward.1} parent=1 // pred_region
      %38 = vsyncadd [#allocation7], 0
      %s39 = sshll.u32 %s5, 4
      %s40 = int_to_ptr.hbm [resolvable:$true] %s39
      %s41 = sshll.u32 [#allocation6], 4
      %s42 = int_to_ptr.vmem [resolvable:$true] %s41
      %47 = dma.hbm_to_vmem [thread:$0]  %s40, 512, %s42, [#allocation7], 128, 128, 8
    $region25: #{forward.1} parent=1 // pred_fallthru
      _
    // Predicated region
    $region26: #{forward.1} parent=1 // pred_check
      _
    $region27: #{forward.1} parent=1 // pred_check_branch
      %49 = sbr.rel (0) target = $region29
    $region28: #{forward.1} parent=1 // pred_region
      _
    $region29: #{forward.1} parent=1 // pred_fallthru
      _
    // Predicated region
    $region30: #{forward.1} parent=1 // pred_check
      _
    $region31: #{forward.1} parent=1 // pred_check_branch
      %51 = sbr.rel (0) target = $region33
    $region32: #{forward.1} parent=1 // pred_region
      %53 = dma.done [#allocation5], 1024
    $region33: #{forward.1} parent=1 // pred_fallthru
      _
    // Predicated region
    $region34: #{forward.1} parent=1 // pred_check
      _
    $region35: #{forward.1} parent=1 // pred_check_branch
      %55 = sbr.rel (0) target = $region37
    $region36: #{forward.1} parent=1 // pred_region
      %57 = dma.done [#allocation7], 512
    $region37: #{forward.1} parent=1 // pred_fallthru
      _
    %v58 = vld [vmem:[%s0] sm:$0xff]
    %v59 = vld [vmem:[%s0 + $0x8] sm:$0xff]
    %v60 = vld [vmem:[%s0 + $0x10] sm:$0xff]
    %v61 = vld [vmem:[%s0 + $0x18] sm:$0xff]
    %v62 = vld [vmem:[%s0 + $0x20] sm:$0xff]
    %v63 = vld [vmem:[%s0 + $0x28] sm:$0xff]
    %v64 = vld [vmem:[%s0 + $0x30] sm:$0xff]
    %v65 = vld [vmem:[%s0 + $0x38] sm:$0xff]
    %v66 = vlaneseq
    %v67 = vand.u32 %v66, 127
    %68 = vset.pattern.permute.xlu0 0
    %69 = vperm.xlu0 %68, %v58
    %v70 = vpop.permute.xlu0 %69
    %71 = vset.pattern.permute.xlu0 0
    %72 = vperm.xlu0 %71, %v59
    %v73 = vpop.permute.xlu0 %72
    %74 = vset.pattern.permute.xlu0 0
    %75 = vperm.xlu0 %74, %v60
    %v76 = vpop.permute.xlu0 %75
    %77 = vset.pattern.permute.xlu0 0
    %78 = vperm.xlu0 %77, %v61
    %v79 = vpop.permute.xlu0 %78
    %80 = vset.pattern.permute.xlu0 0
    %81 = vperm.xlu0 %80, %v62
    %v82 = vpop.permute.xlu0 %81
    %83 = vset.pattern.permute.xlu0 0
    %84 = vperm.xlu0 %83, %v63
    %v85 = vpop.permute.xlu0 %84
    %86 = vset.pattern.permute.xlu0 0
    %87 = vperm.xlu0 %86, %v64
    %v88 = vpop.permute.xlu0 %87
    %89 = vset.pattern.permute.xlu0 0
    %90 = vperm.xlu0 %89, %v65
    %v91 = vpop.permute.xlu0 %90
    %vm92 = vcmp.eq.s32.totalorder %v67, %v70
    %vm93 = vcmp.eq.s32.totalorder %v67, %v73
    %vm94 = vcmp.eq.s32.totalorder %v67, %v76
    %vm95 = vcmp.eq.s32.totalorder %v67, %v79
    %vm96 = vcmp.eq.s32.totalorder %v67, %v82
    %vm97 = vcmp.eq.s32.totalorder %v67, %v85
    %vm98 = vcmp.eq.s32.totalorder %v67, %v88
    %vm99 = vcmp.eq.s32.totalorder %v67, %v91
    %v100 = vsel %vm92, 1, 0
    %v101 = vsel %vm93, 1, 0
    %v102 = vsel %vm94, 1, 0
    %v103 = vsel %vm95, 1, 0
    %v104 = vsel %vm96, 1, 0
    %v105 = vsel %vm97, 1, 0
    %v106 = vsel %vm98, 1, 0
    %v107 = vsel %vm99, 1, 0
    %v108 = vcvt.s32.f32 %v100
    %v109 = vcvt.s32.f32 %v101
    %v110 = vcvt.s32.f32 %v102
    %v111 = vcvt.s32.f32 %v103
    %v112 = vcvt.s32.f32 %v104
    %v113 = vcvt.s32.f32 %v105
    %v114 = vcvt.s32.f32 %v106
    %v115 = vcvt.s32.f32 %v107
    %v116 = vld [vmem:[%s1] sm:$0xff]
    %v117 = vld [vmem:[%s1 + $0x8] sm:$0xff]
    %v118 = vld [vmem:[%s1 + $0x10] sm:$0xff]
    %v119 = vld [vmem:[%s1 + $0x18] sm:$0xff]
    %vm120 = vcmask 261120
    %v122 = vsel %vm120, %v108, 0
    %v125 = vsel %vm120, %v109, 0
    %v128 = vsel %vm120, %v110, 0
    %v131 = vsel %vm120, %v111, 0
    %v134 = vsel %vm120, %v112, 0
    %v137 = vsel %vm120, %v113, 0
    %v140 = vsel %vm120, %v114, 0
    %v143 = vsel %vm120, %v115, 0
    %145 = vmatpush.msra.mxu0 0.0
    %146 = vmatpush.msra.mxu0 0.0
    %147 = vmatpush.msra.mxu0 0.0
    %148 = vmatpush.msra.mxu0 0.0
    %149 = vmatpush.msra.mxu0 0.0
    %150 = vmatpush.msra.mxu0 0.0
    %151 = vmatpush.msra.mxu0 0.0
    %152 = vmatpush.msra.mxu0 0.0
    %153 = vmatpush.msra.mxu0 0.0
    %154 = vmatpush.msra.mxu0 0.0
    %155 = vmatpush.msra.mxu0 0.0
    %156 = vmatpush.msra.mxu0 0.0
    %157 = vmatpush.msra.mxu0 %v119
    %158 = vmatpush.msra.mxu0 %v118
    %159 = vmatpush.msra.mxu0 %v117
    %160 = vmatpush.msra.mxu0 %v116
    %161 = vmatmul.f32.gmra.mxu0 %v122
    %v162 = vpop.f32.mrf.mxu0
    %v163 = vadd.f32 0.0, %v162
    %164 = vmatmul.f32.gmra.mxu0 %v125
    %v165 = vpop.f32.mrf.mxu0
    %v166 = vadd.f32 0.0, %v165
    %167 = vmatmul.f32.gmra.mxu0 %v128
    %v168 = vpop.f32.mrf.mxu0
    %v169 = vadd.f32 0.0, %v168
    %170 = vmatmul.f32.gmra.mxu0 %v131
    %v171 = vpop.f32.mrf.mxu0
    %v172 = vadd.f32 0.0, %v171
    %173 = vmatmul.f32.gmra.mxu0 %v134
    %v174 = vpop.f32.mrf.mxu0
    %v175 = vadd.f32 0.0, %v174
    %176 = vmatmul.f32.gmra.mxu0 %v137
    %v177 = vpop.f32.mrf.mxu0
    %v178 = vadd.f32 0.0, %v177
    %179 = vmatmul.f32.gmra.mxu0 %v140
    %v180 = vpop.f32.mrf.mxu0
    %v181 = vadd.f32 0.0, %v180
    %182 = vmatmul.f32.gmra.mxu0 %v143
    %v183 = vpop.f32.mrf.mxu0
    %v184 = vadd.f32 0.0, %v183
    %185 = vdwg.mxu0
    %vm186 = vcmp.ge.s32.totalorder %v67, 64
    %vm187 = vcmp.lt.s32.totalorder %v67, 96
    %vm188 = vmand %vm186, %vm187
    %v189 = vld [vmem:[#allocation4] sm:$0xff]
    %v190 = vld [vmem:[#allocation4 + $0x8] sm:$0xff]
    %v191 = vld [vmem:[#allocation4 + $0x10] sm:$0xff]
    %v192 = vld [vmem:[#allocation4 + $0x18] sm:$0xff]
    %v193 = vld [vmem:[%s4] sm:$0x1]
    %v194 = vld [vmem:[%s2] sm:$0xff]
    %v195 = vld [vmem:[%s2 + $0x8] sm:$0xff]
    %v196 = vld [vmem:[%s2 + $0x10] sm:$0xff]
    %v197 = vld [vmem:[%s2 + $0x18] sm:$0xff]
    %v199 = vperm.slane %v193, 0
    %v202 = vsel %vm120, %v163, 0
    %v205 = vsel %vm120, %v166, 0
    %v208 = vsel %vm120, %v169, 0
    %v211 = vsel %vm120, %v172, 0
    %v214 = vsel %vm120, %v175, 0
    %v217 = vsel %vm120, %v178, 0
    %v220 = vsel %vm120, %v181, 0
    %v223 = vsel %vm120, %v184, 0
    %225 = vmatpush.msra.mxu0 0.0
    %226 = vmatpush.msra.mxu0 0.0
    %227 = vmatpush.msra.mxu0 0.0
    %228 = vmatpush.msra.mxu0 0.0
    %229 = vmatpush.msra.mxu0 0.0
    %230 = vmatpush.msra.mxu0 0.0
    %231 = vmatpush.msra.mxu0 0.0
    %232 = vmatpush.msra.mxu0 0.0
    %233 = vmatpush.msra.mxu0 0.0
    %234 = vmatpush.msra.mxu0 0.0
    %235 = vmatpush.msra.mxu0 0.0
    %236 = vmatpush.msra.mxu0 0.0
    %237 = vmatpush.msra.mxu0 %v197
    %238 = vmatpush.msra.mxu0 %v196
    %239 = vmatpush.msra.mxu0 %v195
    %240 = vmatpush.msra.mxu0 %v194
    %241 = vmatmul.f32.gmra.mxu0 %v202
    %v242 = vpop.f32.mrf.mxu0
    %v243 = vadd.f32 %v199, %v242
    %244 = vmatmul.f32.gmra.mxu0 %v205
    %v245 = vpop.f32.mrf.mxu0
    %v246 = vadd.f32 %v199, %v245
    %247 = vmatmul.f32.gmra.mxu0 %v208
    %v248 = vpop.f32.mrf.mxu0
    %v249 = vadd.f32 %v199, %v248
    %250 = vmatmul.f32.gmra.mxu0 %v211
    %v251 = vpop.f32.mrf.mxu0
    %v252 = vadd.f32 %v199, %v251
    %253 = vmatmul.f32.gmra.mxu0 %v214
    %v254 = vpop.f32.mrf.mxu0
    %v255 = vadd.f32 %v199, %v254
    %256 = vmatmul.f32.gmra.mxu0 %v217
    %v257 = vpop.f32.mrf.mxu0
    %v258 = vadd.f32 %v199, %v257
    %259 = vmatmul.f32.gmra.mxu0 %v220
    %v260 = vpop.f32.mrf.mxu0
    %v261 = vadd.f32 %v199, %v260
    %262 = vmatmul.f32.gmra.mxu0 %v223
    %v263 = vpop.f32.mrf.mxu0
    %v264 = vadd.f32 %v199, %v263
    %265 = vdwg.mxu0
    %266 = vst [vmem:[#allocation3] sm:$0xff] %v243
    %267 = vst [vmem:[#allocation3 + $0x8] sm:$0xff] %v246
    %268 = vst [vmem:[#allocation3 + $0x10] sm:$0xff] %v249
    %269 = vst [vmem:[#allocation3 + $0x18] sm:$0xff] %v252
    %270 = vst [vmem:[#allocation3 + $0x20] sm:$0xff] %v255
    %271 = vst [vmem:[#allocation3 + $0x28] sm:$0xff] %v258
    %272 = vst [vmem:[#allocation3 + $0x30] sm:$0xff] %v261
    %273 = vst [vmem:[#allocation3 + $0x38] sm:$0xff] %v264
    %v274 = vld [vmem:[#allocation3] sm:$0xff]
    %v276 = vsel %vm120, 0.0, 0
    %278 = vmatpush.msra.mxu0 0.0
    %279 = vmatpush.msra.mxu0 0.0
    %280 = vmatpush.msra.mxu0 0.0
    %281 = vmatpush.msra.mxu0 0.0
    %282 = vmatpush.msra.mxu0 0.0
    %283 = vmatpush.msra.mxu0 0.0
    %284 = vmatpush.msra.mxu0 0.0
    %285 = vmatpush.msra.mxu0 0.0
    %286 = vmatpush.msra.mxu0 0.0
    %287 = vmatpush.msra.mxu0 0.0
    %288 = vmatpush.msra.mxu0 0.0
    %289 = vmatpush.msra.mxu0 0.0
    %290 = vmatpush.msra.mxu0 %v192
    %291 = vmatpush.msra.mxu0 %v191
    %292 = vmatpush.msra.mxu0 %v190
    %293 = vmatpush.msra.mxu0 %v189
    %294 = vmatmul.f32.gmra.mxu0 %v276
    %v295 = vpop.f32.mrf.mxu0
    %v296 = vadd.f32 0.0, %v295
    %297 = vdwg.mxu0
    %v298 = vadd.f32 %v274, %v296
    %v299 = vtanh.pop %v298
    %v300 = vxor.u32 %v298, 2147483648
    %v301 = vmul.f32 %v300, 1.442695
    %v302 = vpow.pop %v301
    %v303 = vadd.f32 %v302, 1.0
    %v304 = vrcp.pop %v303
    %v305 = vmul.f32 %v303, %v304
    %v306 = vsub.f32 1.0, %v305
    %v307 = vmul.f32 %v304, %v306
    %v308 = vadd.f32 %v304, %v307
    %vm309 = vweird.f32 %v303
    %vm310 = vweird.f32 %v304
    %vm311 = vmor %vm309, %vm310
    %v312 = vsel %vm311, %v304, %v308
    %v313 = vand.u32 2147483647, %v303
    %vm314 = vcmp.eq.f32.partialorder %v313, 8.507059e+37
    %v315 = vand.u32 %v303, 2147483648
    %v316 = vor.u32 1.1754944e-38, %v315
    %v317 = vsel %vm314, %v316, %v312
    %v318 = vmul.f32 1.0, %v317
    %v319 = vsel %vm188, %v299, %v318
    %v320 = vmul.f32 %v319, 0.0
    %322 = vrot.lane.b32.xlu0 %v319, 64
    %v323 = vpop.permute.xlu0 %322
    %v325 = vmul.f32 %v319, %v323
    %327 = vrot.lane.b32.xlu0 %v325, 32
    %v328 = vpop.permute.xlu0 %327
    %v330 = vadd.f32 %v320, %v328
    %v331 = vtanh.pop %v330
    %333 = vrot.lane.b32.xlu0 %v331, 64
    %v334 = vpop.permute.xlu0 %333
    %v336 = vmul.f32 %v319, %v334
    %338 = vrot.lane.b32.xlu0 %v336, 32
    %v339 = vpop.permute.xlu0 %338
    %341 = vst.msk [vmem:[#allocation2] sm:$0xff] %vm120, %v339
    %s342 = scalar_lea.vmem [#allocation3], 8
    %v343 = vld [vmem:[%s342] sm:$0xff]
    %v344 = vsel %vm120, %v339, 0
    %346 = vmatpush.msra.mxu0 0.0
    %347 = vmatpush.msra.mxu0 0.0
    %348 = vmatpush.msra.mxu0 0.0
    %349 = vmatpush.msra.mxu0 0.0
    %350 = vmatpush.msra.mxu0 0.0
    %351 = vmatpush.msra.mxu0 0.0
    %352 = vmatpush.msra.mxu0 0.0
    %353 = vmatpush.msra.mxu0 0.0
    %354 = vmatpush.msra.mxu0 0.0
    %355 = vmatpush.msra.mxu0 0.0
    %356 = vmatpush.msra.mxu0 0.0
    %357 = vmatpush.msra.mxu0 0.0
    %358 = vmatpush.msra.mxu0 %v192
    %359 = vmatpush.msra.mxu0 %v191
    %360 = vmatpush.msra.mxu0 %v190
    %361 = vmatpush.msra.mxu0 %v189
    %362 = vmatmul.f32.gmra.mxu0 %v344
    %v363 = vpop.f32.mrf.mxu0
    %v364 = vadd.f32 0.0, %v363
    %365 = vdwg.mxu0
    %v366 = vadd.f32 %v343, %v364
    %v367 = vtanh.pop %v366
    %v368 = vxor.u32 %v366, 2147483648
    %v369 = vmul.f32 %v368, 1.442695
    %v370 = vpow.pop %v369
    %v371 = vadd.f32 %v370, 1.0
    %v372 = vrcp.pop %v371
    %v373 = vmul.f32 %v371, %v372
    %v374 = vsub.f32 1.0, %v373
    %v375 = vmul.f32 %v372, %v374
    %v376 = vadd.f32 %v372, %v375
    %vm377 = vweird.f32 %v371
    %vm378 = vweird.f32 %v372
    %vm379 = vmor %vm377, %vm378
    %v380 = vsel %vm379, %v372, %v376
    %v381 = vand.u32 2147483647, %v371
    %vm382 = vcmp.eq.f32.partialorder %v381, 8.507059e+37
    %v383 = vand.u32 %v371, 2147483648
    %v384 = vor.u32 1.1754944e-38, %v383
    %v385 = vsel %vm382, %v384, %v380
    %v386 = vmul.f32 1.0, %v385
    %v387 = vsel %vm188, %v367, %v386
    %v388 = vmul.f32 %v387, %v330
    %390 = vrot.lane.b32.xlu0 %v387, 64
    %v391 = vpop.permute.xlu0 %390
    %v393 = vmul.f32 %v387, %v391
    %395 = vrot.lane.b32.xlu0 %v393, 32
    %v396 = vpop.permute.xlu0 %395
    %v398 = vadd.f32 %v388, %v396
    %v399 = vtanh.pop %v398
    %401 = vrot.lane.b32.xlu0 %v399, 64
    %v402 = vpop.permute.xlu0 %401
    %v404 = vmul.f32 %v387, %v402
    %406 = vrot.lane.b32.xlu0 %v404, 32
    %v407 = vpop.permute.xlu0 %406
    %s409 = scalar_lea.vmem [#allocation2], 8
    %410 = vst.msk [vmem:[%s409] sm:$0xff] %vm120, %v407
    %s411 = scalar_lea.vmem [#allocation3], 16
    %v412 = vld [vmem:[%s411] sm:$0xff]
    %v413 = vsel %vm120, %v407, 0
    %415 = vmatpush.msra.mxu0 0.0
    %416 = vmatpush.msra.mxu0 0.0
    %417 = vmatpush.msra.mxu0 0.0
    %418 = vmatpush.msra.mxu0 0.0
    %419 = vmatpush.msra.mxu0 0.0
    %420 = vmatpush.msra.mxu0 0.0
    %421 = vmatpush.msra.mxu0 0.0
    %422 = vmatpush.msra.mxu0 0.0
    %423 = vmatpush.msra.mxu0 0.0
    %424 = vmatpush.msra.mxu0 0.0
    %425 = vmatpush.msra.mxu0 0.0
    %426 = vmatpush.msra.mxu0 0.0
    %427 = vmatpush.msra.mxu0 %v192
    %428 = vmatpush.msra.mxu0 %v191
    %429 = vmatpush.msra.mxu0 %v190
    %430 = vmatpush.msra.mxu0 %v189
    %431 = vmatmul.f32.gmra.mxu0 %v413
    %v432 = vpop.f32.mrf.mxu0
    %v433 = vadd.f32 0.0, %v432
    %434 = vdwg.mxu0
    %v435 = vadd.f32 %v412, %v433
    %v436 = vtanh.pop %v435
    %v437 = vxor.u32 %v435, 2147483648
    %v438 = vmul.f32 %v437, 1.442695
    %v439 = vpow.pop %v438
    %v440 = vadd.f32 %v439, 1.0
    %v441 = vrcp.pop %v440
    %v442 = vmul.f32 %v440, %v441
    %v443 = vsub.f32 1.0, %v442
    %v444 = vmul.f32 %v441, %v443
    %v445 = vadd.f32 %v441, %v444
    %vm446 = vweird.f32 %v440
    %vm447 = vweird.f32 %v441
    %vm448 = vmor %vm446, %vm447
    %v449 = vsel %vm448, %v441, %v445
    %v450 = vand.u32 2147483647, %v440
    %vm451 = vcmp.eq.f32.partialorder %v450, 8.507059e+37
    %v452 = vand.u32 %v440, 2147483648
    %v453 = vor.u32 1.1754944e-38, %v452
    %v454 = vsel %vm451, %v453, %v449
    %v455 = vmul.f32 1.0, %v454
    %v456 = vsel %vm188, %v436, %v455
    %v457 = vmul.f32 %v456, %v398
    %459 = vrot.lane.b32.xlu0 %v456, 64
    %v460 = vpop.permute.xlu0 %459
    %v462 = vmul.f32 %v456, %v460
    %464 = vrot.lane.b32.xlu0 %v462, 32
    %v465 = vpop.permute.xlu0 %464
    %v467 = vadd.f32 %v457, %v465
    %v468 = vtanh.pop %v467
    %470 = vrot.lane.b32.xlu0 %v468, 64
    %v471 = vpop.permute.xlu0 %470
    %v473 = vmul.f32 %v456, %v471
    %475 = vrot.lane.b32.xlu0 %v473, 32
    %v476 = vpop.permute.xlu0 %475
    %s478 = scalar_lea.vmem [#allocation2], 16
    %479 = vst.msk [vmem:[%s478] sm:$0xff] %vm120, %v476
    %s480 = scalar_lea.vmem [#allocation3], 24
    %v481 = vld [vmem:[%s480] sm:$0xff]
    %v482 = vsel %vm120, %v476, 0
    %484 = vmatpush.msra.mxu0 0.0
    %485 = vmatpush.msra.mxu0 0.0
    %486 = vmatpush.msra.mxu0 0.0
    %487 = vmatpush.msra.mxu0 0.0
    %488 = vmatpush.msra.mxu0 0.0
    %489 = vmatpush.msra.mxu0 0.0
    %490 = vmatpush.msra.mxu0 0.0
    %491 = vmatpush.msra.mxu0 0.0
    %492 = vmatpush.msra.mxu0 0.0
    %493 = vmatpush.msra.mxu0 0.0
    %494 = vmatpush.msra.mxu0 0.0
    %495 = vmatpush.msra.mxu0 0.0
    %496 = vmatpush.msra.mxu0 %v192
    %497 = vmatpush.msra.mxu0 %v191
    %498 = vmatpush.msra.mxu0 %v190
    %499 = vmatpush.msra.mxu0 %v189
    %500 = vmatmul.f32.gmra.mxu0 %v482
    %v501 = vpop.f32.mrf.mxu0
    %v502 = vadd.f32 0.0, %v501
    %503 = vdwg.mxu0
    %v504 = vadd.f32 %v481, %v502
    %v505 = vtanh.pop %v504
    %v506 = vxor.u32 %v504, 2147483648
    %v507 = vmul.f32 %v506, 1.442695
    %v508 = vpow.pop %v507
    %v509 = vadd.f32 %v508, 1.0
    %v510 = vrcp.pop %v509
    %v511 = vmul.f32 %v509, %v510
    %v512 = vsub.f32 1.0, %v511
    %v513 = vmul.f32 %v510, %v512
    %v514 = vadd.f32 %v510, %v513
    %vm515 = vweird.f32 %v509
    %vm516 = vweird.f32 %v510
    %vm517 = vmor %vm515, %vm516
    %v518 = vsel %vm517, %v510, %v514
    %v519 = vand.u32 2147483647, %v509
    %vm520 = vcmp.eq.f32.partialorder %v519, 8.507059e+37
    %v521 = vand.u32 %v509, 2147483648
    %v522 = vor.u32 1.1754944e-38, %v521
    %v523 = vsel %vm520, %v522, %v518
    %v524 = vmul.f32 1.0, %v523
    %v525 = vsel %vm188, %v505, %v524
    %v526 = vmul.f32 %v525, %v467
    %528 = vrot.lane.b32.xlu0 %v525, 64
    %v529 = vpop.permute.xlu0 %528
    %v531 = vmul.f32 %v525, %v529
    %533 = vrot.lane.b32.xlu0 %v531, 32
    %v534 = vpop.permute.xlu0 %533
    %v536 = vadd.f32 %v526, %v534
    %v537 = vtanh.pop %v536
    %539 = vrot.lane.b32.xlu0 %v537, 64
    %v540 = vpop.permute.xlu0 %539
    %v542 = vmul.f32 %v525, %v540
    %544 = vrot.lane.b32.xlu0 %v542, 32
    %v545 = vpop.permute.xlu0 %544
    %s547 = scalar_lea.vmem [#allocation2], 24
    %548 = vst.msk [vmem:[%s547] sm:$0xff] %vm120, %v545
    %s549 = scalar_lea.vmem [#allocation3], 32
    %v550 = vld [vmem:[%s549] sm:$0xff]
    %v551 = vsel %vm120, %v545, 0
    %553 = vmatpush.msra.mxu0 0.0
    %554 = vmatpush.msra.mxu0 0.0
    %555 = vmatpush.msra.mxu0 0.0
    %556 = vmatpush.msra.mxu0 0.0
    %557 = vmatpush.msra.mxu0 0.0
    %558 = vmatpush.msra.mxu0 0.0
    %559 = vmatpush.msra.mxu0 0.0
    %560 = vmatpush.msra.mxu0 0.0
    %561 = vmatpush.msra.mxu0 0.0
    %562 = vmatpush.msra.mxu0 0.0
    %563 = vmatpush.msra.mxu0 0.0
    %564 = vmatpush.msra.mxu0 0.0
    %565 = vmatpush.msra.mxu0 %v192
    %566 = vmatpush.msra.mxu0 %v191
    %567 = vmatpush.msra.mxu0 %v190
    %568 = vmatpush.msra.mxu0 %v189
    %569 = vmatmul.f32.gmra.mxu0 %v551
    %v570 = vpop.f32.mrf.mxu0
    %v571 = vadd.f32 0.0, %v570
    %572 = vdwg.mxu0
    %v573 = vadd.f32 %v550, %v571
    %v574 = vtanh.pop %v573
    %v575 = vxor.u32 %v573, 2147483648
    %v576 = vmul.f32 %v575, 1.442695
    %v577 = vpow.pop %v576
    %v578 = vadd.f32 %v577, 1.0
    %v579 = vrcp.pop %v578
    %v580 = vmul.f32 %v578, %v579
    %v581 = vsub.f32 1.0, %v580
    %v582 = vmul.f32 %v579, %v581
    %v583 = vadd.f32 %v579, %v582
    %vm584 = vweird.f32 %v578
    %vm585 = vweird.f32 %v579
    %vm586 = vmor %vm584, %vm585
    %v587 = vsel %vm586, %v579, %v583
    %v588 = vand.u32 2147483647, %v578
    %vm589 = vcmp.eq.f32.partialorder %v588, 8.507059e+37
    %v590 = vand.u32 %v578, 2147483648
    %v591 = vor.u32 1.1754944e-38, %v590
    %v592 = vsel %vm589, %v591, %v587
    %v593 = vmul.f32 1.0, %v592
    %v594 = vsel %vm188, %v574, %v593
    %v595 = vmul.f32 %v594, %v536
    %597 = vrot.lane.b32.xlu0 %v594, 64
    %v598 = vpop.permute.xlu0 %597
    %v600 = vmul.f32 %v594, %v598
    %602 = vrot.lane.b32.xlu0 %v600, 32
    %v603 = vpop.permute.xlu0 %602
    %v605 = vadd.f32 %v595, %v603
    %v606 = vtanh.pop %v605
    %608 = vrot.lane.b32.xlu0 %v606, 64
    %v609 = vpop.permute.xlu0 %608
    %v611 = vmul.f32 %v594, %v609
    %613 = vrot.lane.b32.xlu0 %v611, 32
    %v614 = vpop.permute.xlu0 %613
    %s616 = scalar_lea.vmem [#allocation2], 32
    %617 = vst.msk [vmem:[%s616] sm:$0xff] %vm120, %v614
    %s618 = scalar_lea.vmem [#allocation3], 40
    %v619 = vld [vmem:[%s618] sm:$0xff]
    %v620 = vsel %vm120, %v614, 0
    %622 = vmatpush.msra.mxu0 0.0
    %623 = vmatpush.msra.mxu0 0.0
    %624 = vmatpush.msra.mxu0 0.0
    %625 = vmatpush.msra.mxu0 0.0
    %626 = vmatpush.msra.mxu0 0.0
    %627 = vmatpush.msra.mxu0 0.0
    %628 = vmatpush.msra.mxu0 0.0
    %629 = vmatpush.msra.mxu0 0.0
    %630 = vmatpush.msra.mxu0 0.0
    %631 = vmatpush.msra.mxu0 0.0
    %632 = vmatpush.msra.mxu0 0.0
    %633 = vmatpush.msra.mxu0 0.0
    %634 = vmatpush.msra.mxu0 %v192
    %635 = vmatpush.msra.mxu0 %v191
    %636 = vmatpush.msra.mxu0 %v190
    %637 = vmatpush.msra.mxu0 %v189
    %638 = vmatmul.f32.gmra.mxu0 %v620
    %v639 = vpop.f32.mrf.mxu0
    %v640 = vadd.f32 0.0, %v639
    %641 = vdwg.mxu0
    %v642 = vadd.f32 %v619, %v640
    %v643 = vtanh.pop %v642
    %v644 = vxor.u32 %v642, 2147483648
    %v645 = vmul.f32 %v644, 1.442695
    %v646 = vpow.pop %v645
    %v647 = vadd.f32 %v646, 1.0
    %v648 = vrcp.pop %v647
    %v649 = vmul.f32 %v647, %v648
    %v650 = vsub.f32 1.0, %v649
    %v651 = vmul.f32 %v648, %v650
    %v652 = vadd.f32 %v648, %v651
    %vm653 = vweird.f32 %v647
    %vm654 = vweird.f32 %v648
    %vm655 = vmor %vm653, %vm654
    %v656 = vsel %vm655, %v648, %v652
    %v657 = vand.u32 2147483647, %v647
    %vm658 = vcmp.eq.f32.partialorder %v657, 8.507059e+37
    %v659 = vand.u32 %v647, 2147483648
    %v660 = vor.u32 1.1754944e-38, %v659
    %v661 = vsel %vm658, %v660, %v656
    %v662 = vmul.f32 1.0, %v661
    %v663 = vsel %vm188, %v643, %v662
    %v664 = vmul.f32 %v663, %v605
    %666 = vrot.lane.b32.xlu0 %v663, 64
    %v667 = vpop.permute.xlu0 %666
    %v669 = vmul.f32 %v663, %v667
    %671 = vrot.lane.b32.xlu0 %v669, 32
    %v672 = vpop.permute.xlu0 %671
    %v674 = vadd.f32 %v664, %v672
    %v675 = vtanh.pop %v674
    %677 = vrot.lane.b32.xlu0 %v675, 64
    %v678 = vpop.permute.xlu0 %677
    %v680 = vmul.f32 %v663, %v678
    %682 = vrot.lane.b32.xlu0 %v680, 32
    %v683 = vpop.permute.xlu0 %682
    %s685 = scalar_lea.vmem [#allocation2], 40
    %686 = vst.msk [vmem:[%s685] sm:$0xff] %vm120, %v683
    %s687 = scalar_lea.vmem [#allocation3], 48
    %v688 = vld [vmem:[%s687] sm:$0xff]
    %v689 = vsel %vm120, %v683, 0
    %691 = vmatpush.msra.mxu0 0.0
    %692 = vmatpush.msra.mxu0 0.0
    %693 = vmatpush.msra.mxu0 0.0
    %694 = vmatpush.msra.mxu0 0.0
    %695 = vmatpush.msra.mxu0 0.0
    %696 = vmatpush.msra.mxu0 0.0
    %697 = vmatpush.msra.mxu0 0.0
    %698 = vmatpush.msra.mxu0 0.0
    %699 = vmatpush.msra.mxu0 0.0
    %700 = vmatpush.msra.mxu0 0.0
    %701 = vmatpush.msra.mxu0 0.0
    %702 = vmatpush.msra.mxu0 0.0
    %703 = vmatpush.msra.mxu0 %v192
    %704 = vmatpush.msra.mxu0 %v191
    %705 = vmatpush.msra.mxu0 %v190
    %706 = vmatpush.msra.mxu0 %v189
    %707 = vmatmul.f32.gmra.mxu0 %v689
    %v708 = vpop.f32.mrf.mxu0
    %v709 = vadd.f32 0.0, %v708
    %710 = vdwg.mxu0
    %v711 = vadd.f32 %v688, %v709
    %v712 = vtanh.pop %v711
    %v713 = vxor.u32 %v711, 2147483648
    %v714 = vmul.f32 %v713, 1.442695
    %v715 = vpow.pop %v714
    %v716 = vadd.f32 %v715, 1.0
    %v717 = vrcp.pop %v716
    %v718 = vmul.f32 %v716, %v717
    %v719 = vsub.f32 1.0, %v718
    %v720 = vmul.f32 %v717, %v719
    %v721 = vadd.f32 %v717, %v720
    %vm722 = vweird.f32 %v716
    %vm723 = vweird.f32 %v717
    %vm724 = vmor %vm722, %vm723
    %v725 = vsel %vm724, %v717, %v721
    %v726 = vand.u32 2147483647, %v716
    %vm727 = vcmp.eq.f32.partialorder %v726, 8.507059e+37
    %v728 = vand.u32 %v716, 2147483648
    %v729 = vor.u32 1.1754944e-38, %v728
    %v730 = vsel %vm727, %v729, %v725
    %v731 = vmul.f32 1.0, %v730
    %v732 = vsel %vm188, %v712, %v731
    %v733 = vmul.f32 %v732, %v674
    %735 = vrot.lane.b32.xlu0 %v732, 64
    %v736 = vpop.permute.xlu0 %735
    %v738 = vmul.f32 %v732, %v736
    %740 = vrot.lane.b32.xlu0 %v738, 32
    %v741 = vpop.permute.xlu0 %740
    %v743 = vadd.f32 %v733, %v741
    %v744 = vtanh.pop %v743
    %746 = vrot.lane.b32.xlu0 %v744, 64
    %v747 = vpop.permute.xlu0 %746
    %v749 = vmul.f32 %v732, %v747
    %751 = vrot.lane.b32.xlu0 %v749, 32
    %v752 = vpop.permute.xlu0 %751
    %s754 = scalar_lea.vmem [#allocation2], 48
    %755 = vst.msk [vmem:[%s754] sm:$0xff] %vm120, %v752
    %s756 = scalar_lea.vmem [#allocation3], 56
    %v757 = vld [vmem:[%s756] sm:$0xff]
    %v758 = vsel %vm120, %v752, 0
    %760 = vmatpush.msra.mxu0 0.0
    %761 = vmatpush.msra.mxu0 0.0
    %762 = vmatpush.msra.mxu0 0.0
    %763 = vmatpush.msra.mxu0 0.0
    %764 = vmatpush.msra.mxu0 0.0
    %765 = vmatpush.msra.mxu0 0.0
    %766 = vmatpush.msra.mxu0 0.0
    %767 = vmatpush.msra.mxu0 0.0
    %768 = vmatpush.msra.mxu0 0.0
    %769 = vmatpush.msra.mxu0 0.0
    %770 = vmatpush.msra.mxu0 0.0
    %771 = vmatpush.msra.mxu0 0.0
    %772 = vmatpush.msra.mxu0 %v192
    %773 = vmatpush.msra.mxu0 %v191
    %774 = vmatpush.msra.mxu0 %v190
    %775 = vmatpush.msra.mxu0 %v189
    %776 = vmatmul.f32.gmra.mxu0 %v758
    %v777 = vpop.f32.mrf.mxu0
    %v778 = vadd.f32 0.0, %v777
    %779 = vdwg.mxu0
    %v780 = vadd.f32 %v757, %v778
    %v781 = vtanh.pop %v780
    %v782 = vxor.u32 %v780, 2147483648
    %v783 = vmul.f32 %v782, 1.442695
    %v784 = vpow.pop %v783
    %v785 = vadd.f32 %v784, 1.0
    %v786 = vrcp.pop %v785
    %v787 = vmul.f32 %v785, %v786
    %v788 = vsub.f32 1.0, %v787
    %v789 = vmul.f32 %v786, %v788
    %v790 = vadd.f32 %v786, %v789
    %vm791 = vweird.f32 %v785
    %vm792 = vweird.f32 %v786
    %vm793 = vmor %vm791, %vm792
    %v794 = vsel %vm793, %v786, %v790
    %v795 = vand.u32 2147483647, %v785
    %vm796 = vcmp.eq.f32.partialorder %v795, 8.507059e+37
    %v797 = vand.u32 %v785, 2147483648
    %v798 = vor.u32 1.1754944e-38, %v797
    %v799 = vsel %vm796, %v798, %v794
    %v800 = vmul.f32 1.0, %v799
    %v801 = vsel %vm188, %v781, %v800
    %v802 = vmul.f32 %v801, %v743
    %804 = vrot.lane.b32.xlu0 %v801, 64
    %v805 = vpop.permute.xlu0 %804
    %v807 = vmul.f32 %v801, %v805
    %809 = vrot.lane.b32.xlu0 %v807, 32
    %v810 = vpop.permute.xlu0 %809
    %v812 = vadd.f32 %v802, %v810
    %v813 = vtanh.pop %v812
    %815 = vrot.lane.b32.xlu0 %v813, 64
    %v816 = vpop.permute.xlu0 %815
    %v818 = vmul.f32 %v801, %v816
    %820 = vrot.lane.b32.xlu0 %v818, 32
    %v821 = vpop.permute.xlu0 %820
    %s823 = scalar_lea.vmem [#allocation2], 56
    %824 = vst.msk [vmem:[%s823] sm:$0xff] %vm120, %v821
    %s825 = scalar_lea.vmem [#allocation4], 32
    %v826 = vld [vmem:[%s825] sm:$0xff]
    %v827 = vld [vmem:[%s825 + $0x8] sm:$0xff]
    %v828 = vld [vmem:[%s825 + $0x10] sm:$0xff]
    %v829 = vld [vmem:[%s825 + $0x18] sm:$0xff]
    %s830 = scalar_lea.vmem %s4, 1
    %v831 = vld [vmem:[%s830] sm:$0x1]
    %v832 = vld [vmem:[#allocation2] sm:$0xff]
    %v833 = vld [vmem:[#allocation2 + $0x8] sm:$0xff]
    %v834 = vld [vmem:[#allocation2 + $0x10] sm:$0xff]
    %v835 = vld [vmem:[#allocation2 + $0x18] sm:$0xff]
    %v836 = vld [vmem:[#allocation2 + $0x20] sm:$0xff]
    %v837 = vld [vmem:[#allocation2 + $0x28] sm:$0xff]
    %v838 = vld [vmem:[#allocation2 + $0x30] sm:$0xff]
    %v839 = vld [vmem:[#allocation2 + $0x38] sm:$0xff]
    %s840 = scalar_lea.vmem %s2, 32
    %v841 = vld [vmem:[%s840] sm:$0xff]
    %v842 = vld [vmem:[%s840 + $0x8] sm:$0xff]
    %v843 = vld [vmem:[%s840 + $0x10] sm:$0xff]
    %v844 = vld [vmem:[%s840 + $0x18] sm:$0xff]
    %v846 = vperm.slane %v831, 0
    %v849 = vsel %vm120, %v832, 0
    %v852 = vsel %vm120, %v833, 0
    %v855 = vsel %vm120, %v834, 0
    %v858 = vsel %vm120, %v835, 0
    %v861 = vsel %vm120, %v836, 0
    %v864 = vsel %vm120, %v837, 0
    %v867 = vsel %vm120, %v838, 0
    %v870 = vsel %vm120, %v839, 0
    %872 = vmatpush.msra.mxu0 0.0
    %873 = vmatpush.msra.mxu0 0.0
    %874 = vmatpush.msra.mxu0 0.0
    %875 = vmatpush.msra.mxu0 0.0
    %876 = vmatpush.msra.mxu0 0.0
    %877 = vmatpush.msra.mxu0 0.0
    %878 = vmatpush.msra.mxu0 0.0
    %879 = vmatpush.msra.mxu0 0.0
    %880 = vmatpush.msra.mxu0 0.0
    %881 = vmatpush.msra.mxu0 0.0
    %882 = vmatpush.msra.mxu0 0.0
    %883 = vmatpush.msra.mxu0 0.0
    %884 = vmatpush.msra.mxu0 %v844
    %885 = vmatpush.msra.mxu0 %v843
    %886 = vmatpush.msra.mxu0 %v842
    %887 = vmatpush.msra.mxu0 %v841
    %888 = vmatmul.f32.gmra.mxu0 %v849
    %v889 = vpop.f32.mrf.mxu0
    %v890 = vadd.f32 %v846, %v889
    %891 = vmatmul.f32.gmra.mxu0 %v852
    %v892 = vpop.f32.mrf.mxu0
    %v893 = vadd.f32 %v846, %v892
    %894 = vmatmul.f32.gmra.mxu0 %v855
    %v895 = vpop.f32.mrf.mxu0
    %v896 = vadd.f32 %v846, %v895
    %897 = vmatmul.f32.gmra.mxu0 %v858
    %v898 = vpop.f32.mrf.mxu0
    %v899 = vadd.f32 %v846, %v898
    %900 = vmatmul.f32.gmra.mxu0 %v861
    %v901 = vpop.f32.mrf.mxu0
    %v902 = vadd.f32 %v846, %v901
    %903 = vmatmul.f32.gmra.mxu0 %v864
    %v904 = vpop.f32.mrf.mxu0
    %v905 = vadd.f32 %v846, %v904
    %906 = vmatmul.f32.gmra.mxu0 %v867
    %v907 = vpop.f32.mrf.mxu0
    %v908 = vadd.f32 %v846, %v907
    %909 = vmatmul.f32.gmra.mxu0 %v870
    %v910 = vpop.f32.mrf.mxu0
    %v911 = vadd.f32 %v846, %v910
    %912 = vdwg.mxu0
    %913 = vst [vmem:[#allocation3] sm:$0xff] %v890
    %914 = vst [vmem:[#allocation3 + $0x8] sm:$0xff] %v893
    %915 = vst [vmem:[#allocation3 + $0x10] sm:$0xff] %v896
    %916 = vst [vmem:[#allocation3 + $0x18] sm:$0xff] %v899
    %917 = vst [vmem:[#allocation3 + $0x20] sm:$0xff] %v902
    %918 = vst [vmem:[#allocation3 + $0x28] sm:$0xff] %v905
    %919 = vst [vmem:[#allocation3 + $0x30] sm:$0xff] %v908
    %920 = vst [vmem:[#allocation3 + $0x38] sm:$0xff] %v911
    %v921 = vld [vmem:[#allocation3] sm:$0xff]
    %922 = vmatpush.msra.mxu0 0.0
    %923 = vmatpush.msra.mxu0 0.0
    %924 = vmatpush.msra.mxu0 0.0
    %925 = vmatpush.msra.mxu0 0.0
    %926 = vmatpush.msra.mxu0 0.0
    %927 = vmatpush.msra.mxu0 0.0
    %928 = vmatpush.msra.mxu0 0.0
    %929 = vmatpush.msra.mxu0 0.0
    %930 = vmatpush.msra.mxu0 0.0
    %931 = vmatpush.msra.mxu0 0.0
    %932 = vmatpush.msra.mxu0 0.0
    %933 = vmatpush.msra.mxu0 0.0
    %934 = vmatpush.msra.mxu0 %v829
    %935 = vmatpush.msra.mxu0 %v828
    %936 = vmatpush.msra.mxu0 %v827
    %937 = vmatpush.msra.mxu0 %v826
    %938 = vmatmul.f32.gmra.mxu0 %v276
    %v939 = vpop.f32.mrf.mxu0
    %v940 = vadd.f32 0.0, %v939
    %941 = vdwg.mxu0
    %v942 = vadd.f32 %v921, %v940
    %v943 = vtanh.pop %v942
    %v944 = vxor.u32 %v942, 2147483648
    %v945 = vmul.f32 %v944, 1.442695
    %v946 = vpow.pop %v945
    %v947 = vadd.f32 %v946, 1.0
    %v948 = vrcp.pop %v947
    %v949 = vmul.f32 %v947, %v948
    %v950 = vsub.f32 1.0, %v949
    %v951 = vmul.f32 %v948, %v950
    %v952 = vadd.f32 %v948, %v951
    %vm953 = vweird.f32 %v947
    %vm954 = vweird.f32 %v948
    %vm955 = vmor %vm953, %vm954
    %v956 = vsel %vm955, %v948, %v952
    %v957 = vand.u32 2147483647, %v947
    %vm958 = vcmp.eq.f32.partialorder %v957, 8.507059e+37
    %v959 = vand.u32 %v947, 2147483648
    %v960 = vor.u32 1.1754944e-38, %v959
    %v961 = vsel %vm958, %v960, %v956
    %v962 = vmul.f32 1.0, %v961
    %v963 = vsel %vm188, %v943, %v962
    %v964 = vmul.f32 %v963, 0.0
    %966 = vrot.lane.b32.xlu0 %v963, 64
    %v967 = vpop.permute.xlu0 %966
    %v969 = vmul.f32 %v963, %v967
    %971 = vrot.lane.b32.xlu0 %v969, 32
    %v972 = vpop.permute.xlu0 %971
    %v974 = vadd.f32 %v964, %v972
    %v975 = vtanh.pop %v974
    %977 = vrot.lane.b32.xlu0 %v975, 64
    %v978 = vpop.permute.xlu0 %977
    %v980 = vmul.f32 %v963, %v978
    %982 = vrot.lane.b32.xlu0 %v980, 32
    %v983 = vpop.permute.xlu0 %982
    %985 = vst.msk [vmem:[#allocation2] sm:$0xff] %vm120, %v983
    %v986 = vld [vmem:[%s342] sm:$0xff]
    %v987 = vsel %vm120, %v983, 0
    %989 = vmatpush.msra.mxu0 0.0
    %990 = vmatpush.msra.mxu0 0.0
    %991 = vmatpush.msra.mxu0 0.0
    %992 = vmatpush.msra.mxu0 0.0
    %993 = vmatpush.msra.mxu0 0.0
    %994 = vmatpush.msra.mxu0 0.0
    %995 = vmatpush.msra.mxu0 0.0
    %996 = vmatpush.msra.mxu0 0.0
    %997 = vmatpush.msra.mxu0 0.0
    %998 = vmatpush.msra.mxu0 0.0
    %999 = vmatpush.msra.mxu0 0.0
    %1000 = vmatpush.msra.mxu0 0.0
    %1001 = vmatpush.msra.mxu0 %v829
    %1002 = vmatpush.msra.mxu0 %v828
    %1003 = vmatpush.msra.mxu0 %v827
    %1004 = vmatpush.msra.mxu0 %v826
    %1005 = vmatmul.f32.gmra.mxu0 %v987
    %v1006 = vpop.f32.mrf.mxu0
    %v1007 = vadd.f32 0.0, %v1006
    %1008 = vdwg.mxu0
    %v1009 = vadd.f32 %v986, %v1007
    %v1010 = vtanh.pop %v1009
    %v1011 = vxor.u32 %v1009, 2147483648
    %v1012 = vmul.f32 %v1011, 1.442695
    %v1013 = vpow.pop %v1012
    %v1014 = vadd.f32 %v1013, 1.0
    %v1015 = vrcp.pop %v1014
    %v1016 = vmul.f32 %v1014, %v1015
    %v1017 = vsub.f32 1.0, %v1016
    %v1018 = vmul.f32 %v1015, %v1017
    %v1019 = vadd.f32 %v1015, %v1018
    %vm1020 = vweird.f32 %v1014
    %vm1021 = vweird.f32 %v1015
    %vm1022 = vmor %vm1020, %vm1021
    %v1023 = vsel %vm1022, %v1015, %v1019
    %v1024 = vand.u32 2147483647, %v1014
    %vm1025 = vcmp.eq.f32.partialorder %v1024, 8.507059e+37
    %v1026 = vand.u32 %v1014, 2147483648
    %v1027 = vor.u32 1.1754944e-38, %v1026
    %v1028 = vsel %vm1025, %v1027, %v1023
    %v1029 = vmul.f32 1.0, %v1028
    %v1030 = vsel %vm188, %v1010, %v1029
    %v1031 = vmul.f32 %v1030, %v974
    %1033 = vrot.lane.b32.xlu0 %v1030, 64
    %v1034 = vpop.permute.xlu0 %1033
    %v1036 = vmul.f32 %v1030, %v1034
    %1038 = vrot.lane.b32.xlu0 %v1036, 32
    %v1039 = vpop.permute.xlu0 %1038
    %v1041 = vadd.f32 %v1031, %v1039
    %v1042 = vtanh.pop %v1041
    %1044 = vrot.lane.b32.xlu0 %v1042, 64
    %v1045 = vpop.permute.xlu0 %1044
    %v1047 = vmul.f32 %v1030, %v1045
    %1049 = vrot.lane.b32.xlu0 %v1047, 32
    %v1050 = vpop.permute.xlu0 %1049
    %1052 = vst.msk [vmem:[%s409] sm:$0xff] %vm120, %v1050
    %v1053 = vld [vmem:[%s411] sm:$0xff]
    %v1054 = vsel %vm120, %v1050, 0
    %1056 = vmatpush.msra.mxu0 0.0
    %1057 = vmatpush.msra.mxu0 0.0
    %1058 = vmatpush.msra.mxu0 0.0
    %1059 = vmatpush.msra.mxu0 0.0
    %1060 = vmatpush.msra.mxu0 0.0
    %1061 = vmatpush.msra.mxu0 0.0
    %1062 = vmatpush.msra.mxu0 0.0
    %1063 = vmatpush.msra.mxu0 0.0
    %1064 = vmatpush.msra.mxu0 0.0
    %1065 = vmatpush.msra.mxu0 0.0
    %1066 = vmatpush.msra.mxu0 0.0
    %1067 = vmatpush.msra.mxu0 0.0
    %1068 = vmatpush.msra.mxu0 %v829
    %1069 = vmatpush.msra.mxu0 %v828
    %1070 = vmatpush.msra.mxu0 %v827
    %1071 = vmatpush.msra.mxu0 %v826
    %1072 = vmatmul.f32.gmra.mxu0 %v1054
    %v1073 = vpop.f32.mrf.mxu0
    %v1074 = vadd.f32 0.0, %v1073
    %1075 = vdwg.mxu0
    %v1076 = vadd.f32 %v1053, %v1074
    %v1077 = vtanh.pop %v1076
    %v1078 = vxor.u32 %v1076, 2147483648
    %v1079 = vmul.f32 %v1078, 1.442695
    %v1080 = vpow.pop %v1079
    %v1081 = vadd.f32 %v1080, 1.0
    %v1082 = vrcp.pop %v1081
    %v1083 = vmul.f32 %v1081, %v1082
    %v1084 = vsub.f32 1.0, %v1083
    %v1085 = vmul.f32 %v1082, %v1084
    %v1086 = vadd.f32 %v1082, %v1085
    %vm1087 = vweird.f32 %v1081
    %vm1088 = vweird.f32 %v1082
    %vm1089 = vmor %vm1087, %vm1088
    %v1090 = vsel %vm1089, %v1082, %v1086
    %v1091 = vand.u32 2147483647, %v1081
    %vm1092 = vcmp.eq.f32.partialorder %v1091, 8.507059e+37
    %v1093 = vand.u32 %v1081, 2147483648
    %v1094 = vor.u32 1.1754944e-38, %v1093
    %v1095 = vsel %vm1092, %v1094, %v1090
    %v1096 = vmul.f32 1.0, %v1095
    %v1097 = vsel %vm188, %v1077, %v1096
    %v1098 = vmul.f32 %v1097, %v1041
    %1100 = vrot.lane.b32.xlu0 %v1097, 64
    %v1101 = vpop.permute.xlu0 %1100
    %v1103 = vmul.f32 %v1097, %v1101
    %1105 = vrot.lane.b32.xlu0 %v1103, 32
    %v1106 = vpop.permute.xlu0 %1105
    %v1108 = vadd.f32 %v1098, %v1106
    %v1109 = vtanh.pop %v1108
    %1111 = vrot.lane.b32.xlu0 %v1109, 64
    %v1112 = vpop.permute.xlu0 %1111
    %v1114 = vmul.f32 %v1097, %v1112
    %1116 = vrot.lane.b32.xlu0 %v1114, 32
    %v1117 = vpop.permute.xlu0 %1116
    %1119 = vst.msk [vmem:[%s478] sm:$0xff] %vm120, %v1117
    %v1120 = vld [vmem:[%s480] sm:$0xff]
    %v1121 = vsel %vm120, %v1117, 0
    %1123 = vmatpush.msra.mxu0 0.0
    %1124 = vmatpush.msra.mxu0 0.0
    %1125 = vmatpush.msra.mxu0 0.0
    %1126 = vmatpush.msra.mxu0 0.0
    %1127 = vmatpush.msra.mxu0 0.0
    %1128 = vmatpush.msra.mxu0 0.0
    %1129 = vmatpush.msra.mxu0 0.0
    %1130 = vmatpush.msra.mxu0 0.0
    %1131 = vmatpush.msra.mxu0 0.0
    %1132 = vmatpush.msra.mxu0 0.0
    %1133 = vmatpush.msra.mxu0 0.0
    %1134 = vmatpush.msra.mxu0 0.0
    %1135 = vmatpush.msra.mxu0 %v829
    %1136 = vmatpush.msra.mxu0 %v828
    %1137 = vmatpush.msra.mxu0 %v827
    %1138 = vmatpush.msra.mxu0 %v826
    %1139 = vmatmul.f32.gmra.mxu0 %v1121
    %v1140 = vpop.f32.mrf.mxu0
    %v1141 = vadd.f32 0.0, %v1140
    %1142 = vdwg.mxu0
    %v1143 = vadd.f32 %v1120, %v1141
    %v1144 = vtanh.pop %v1143
    %v1145 = vxor.u32 %v1143, 2147483648
    %v1146 = vmul.f32 %v1145, 1.442695
    %v1147 = vpow.pop %v1146
    %v1148 = vadd.f32 %v1147, 1.0
    %v1149 = vrcp.pop %v1148
    %v1150 = vmul.f32 %v1148, %v1149
    %v1151 = vsub.f32 1.0, %v1150
    %v1152 = vmul.f32 %v1149, %v1151
    %v1153 = vadd.f32 %v1149, %v1152
    %vm1154 = vweird.f32 %v1148
    %vm1155 = vweird.f32 %v1149
    %vm1156 = vmor %vm1154, %vm1155
    %v1157 = vsel %vm1156, %v1149, %v1153
    %v1158 = vand.u32 2147483647, %v1148
    %vm1159 = vcmp.eq.f32.partialorder %v1158, 8.507059e+37
    %v1160 = vand.u32 %v1148, 2147483648
    %v1161 = vor.u32 1.1754944e-38, %v1160
    %v1162 = vsel %vm1159, %v1161, %v1157
    %v1163 = vmul.f32 1.0, %v1162
    %v1164 = vsel %vm188, %v1144, %v1163
    %v1165 = vmul.f32 %v1164, %v1108
    %1167 = vrot.lane.b32.xlu0 %v1164, 64
    %v1168 = vpop.permute.xlu0 %1167
    %v1170 = vmul.f32 %v1164, %v1168
    %1172 = vrot.lane.b32.xlu0 %v1170, 32
    %v1173 = vpop.permute.xlu0 %1172
    %v1175 = vadd.f32 %v1165, %v1173
    %v1176 = vtanh.pop %v1175
    %1178 = vrot.lane.b32.xlu0 %v1176, 64
    %v1179 = vpop.permute.xlu0 %1178
    %v1181 = vmul.f32 %v1164, %v1179
    %1183 = vrot.lane.b32.xlu0 %v1181, 32
    %v1184 = vpop.permute.xlu0 %1183
    %1186 = vst.msk [vmem:[%s547] sm:$0xff] %vm120, %v1184
    %v1187 = vld [vmem:[%s549] sm:$0xff]
    %v1188 = vsel %vm120, %v1184, 0
    %1190 = vmatpush.msra.mxu0 0.0
    %1191 = vmatpush.msra.mxu0 0.0
    %1192 = vmatpush.msra.mxu0 0.0
    %1193 = vmatpush.msra.mxu0 0.0
    %1194 = vmatpush.msra.mxu0 0.0
    %1195 = vmatpush.msra.mxu0 0.0
    %1196 = vmatpush.msra.mxu0 0.0
    %1197 = vmatpush.msra.mxu0 0.0
    %1198 = vmatpush.msra.mxu0 0.0
    %1199 = vmatpush.msra.mxu0 0.0
    %1200 = vmatpush.msra.mxu0 0.0
    %1201 = vmatpush.msra.mxu0 0.0
    %1202 = vmatpush.msra.mxu0 %v829
    %1203 = vmatpush.msra.mxu0 %v828
    %1204 = vmatpush.msra.mxu0 %v827
    %1205 = vmatpush.msra.mxu0 %v826
    %1206 = vmatmul.f32.gmra.mxu0 %v1188
    %v1207 = vpop.f32.mrf.mxu0
    %v1208 = vadd.f32 0.0, %v1207
    %1209 = vdwg.mxu0
    %v1210 = vadd.f32 %v1187, %v1208
    %v1211 = vtanh.pop %v1210
    %v1212 = vxor.u32 %v1210, 2147483648
    %v1213 = vmul.f32 %v1212, 1.442695
    %v1214 = vpow.pop %v1213
    %v1215 = vadd.f32 %v1214, 1.0
    %v1216 = vrcp.pop %v1215
    %v1217 = vmul.f32 %v1215, %v1216
    %v1218 = vsub.f32 1.0, %v1217
    %v1219 = vmul.f32 %v1216, %v1218
    %v1220 = vadd.f32 %v1216, %v1219
    %vm1221 = vweird.f32 %v1215
    %vm1222 = vweird.f32 %v1216
    %vm1223 = vmor %vm1221, %vm1222
    %v1224 = vsel %vm1223, %v1216, %v1220
    %v1225 = vand.u32 2147483647, %v1215
    %vm1226 = vcmp.eq.f32.partialorder %v1225, 8.507059e+37
    %v1227 = vand.u32 %v1215, 2147483648
    %v1228 = vor.u32 1.1754944e-38, %v1227
    %v1229 = vsel %vm1226, %v1228, %v1224
    %v1230 = vmul.f32 1.0, %v1229
    %v1231 = vsel %vm188, %v1211, %v1230
    %v1232 = vmul.f32 %v1231, %v1175
    %1234 = vrot.lane.b32.xlu0 %v1231, 64
    %v1235 = vpop.permute.xlu0 %1234
    %v1237 = vmul.f32 %v1231, %v1235
    %1239 = vrot.lane.b32.xlu0 %v1237, 32
    %v1240 = vpop.permute.xlu0 %1239
    %v1242 = vadd.f32 %v1232, %v1240
    %v1243 = vtanh.pop %v1242
    %1245 = vrot.lane.b32.xlu0 %v1243, 64
    %v1246 = vpop.permute.xlu0 %1245
    %v1248 = vmul.f32 %v1231, %v1246
    %1250 = vrot.lane.b32.xlu0 %v1248, 32
    %v1251 = vpop.permute.xlu0 %1250
    %1253 = vst.msk [vmem:[%s616] sm:$0xff] %vm120, %v1251
    %v1254 = vld [vmem:[%s618] sm:$0xff]
    %v1255 = vsel %vm120, %v1251, 0
    %1257 = vmatpush.msra.mxu0 0.0
    %1258 = vmatpush.msra.mxu0 0.0
    %1259 = vmatpush.msra.mxu0 0.0
    %1260 = vmatpush.msra.mxu0 0.0
    %1261 = vmatpush.msra.mxu0 0.0
    %1262 = vmatpush.msra.mxu0 0.0
    %1263 = vmatpush.msra.mxu0 0.0
    %1264 = vmatpush.msra.mxu0 0.0
    %1265 = vmatpush.msra.mxu0 0.0
    %1266 = vmatpush.msra.mxu0 0.0
    %1267 = vmatpush.msra.mxu0 0.0
    %1268 = vmatpush.msra.mxu0 0.0
    %1269 = vmatpush.msra.mxu0 %v829
    %1270 = vmatpush.msra.mxu0 %v828
    %1271 = vmatpush.msra.mxu0 %v827
    %1272 = vmatpush.msra.mxu0 %v826
    %1273 = vmatmul.f32.gmra.mxu0 %v1255
    %v1274 = vpop.f32.mrf.mxu0
    %v1275 = vadd.f32 0.0, %v1274
    %1276 = vdwg.mxu0
    %v1277 = vadd.f32 %v1254, %v1275
    %v1278 = vtanh.pop %v1277
    %v1279 = vxor.u32 %v1277, 2147483648
    %v1280 = vmul.f32 %v1279, 1.442695
    %v1281 = vpow.pop %v1280
    %v1282 = vadd.f32 %v1281, 1.0
    %v1283 = vrcp.pop %v1282
    %v1284 = vmul.f32 %v1282, %v1283
    %v1285 = vsub.f32 1.0, %v1284
    %v1286 = vmul.f32 %v1283, %v1285
    %v1287 = vadd.f32 %v1283, %v1286
    %vm1288 = vweird.f32 %v1282
    %vm1289 = vweird.f32 %v1283
    %vm1290 = vmor %vm1288, %vm1289
    %v1291 = vsel %vm1290, %v1283, %v1287
    %v1292 = vand.u32 2147483647, %v1282
    %vm1293 = vcmp.eq.f32.partialorder %v1292, 8.507059e+37
    %v1294 = vand.u32 %v1282, 2147483648
    %v1295 = vor.u32 1.1754944e-38, %v1294
    %v1296 = vsel %vm1293, %v1295, %v1291
    %v1297 = vmul.f32 1.0, %v1296
    %v1298 = vsel %vm188, %v1278, %v1297
    %v1299 = vmul.f32 %v1298, %v1242
    %1301 = vrot.lane.b32.xlu0 %v1298, 64
    %v1302 = vpop.permute.xlu0 %1301
    %v1304 = vmul.f32 %v1298, %v1302
    %1306 = vrot.lane.b32.xlu0 %v1304, 32
    %v1307 = vpop.permute.xlu0 %1306
    %v1309 = vadd.f32 %v1299, %v1307
    %v1310 = vtanh.pop %v1309
    %1312 = vrot.lane.b32.xlu0 %v1310, 64
    %v1313 = vpop.permute.xlu0 %1312
    %v1315 = vmul.f32 %v1298, %v1313
    %1317 = vrot.lane.b32.xlu0 %v1315, 32
    %v1318 = vpop.permute.xlu0 %1317
    %1320 = vst.msk [vmem:[%s685] sm:$0xff] %vm120, %v1318
    %v1321 = vld [vmem:[%s687] sm:$0xff]
    %v1322 = vsel %vm120, %v1318, 0
    %1324 = vmatpush.msra.mxu0 0.0
    %1325 = vmatpush.msra.mxu0 0.0
    %1326 = vmatpush.msra.mxu0 0.0
    %1327 = vmatpush.msra.mxu0 0.0
    %1328 = vmatpush.msra.mxu0 0.0
    %1329 = vmatpush.msra.mxu0 0.0
    %1330 = vmatpush.msra.mxu0 0.0
    %1331 = vmatpush.msra.mxu0 0.0
    %1332 = vmatpush.msra.mxu0 0.0
    %1333 = vmatpush.msra.mxu0 0.0
    %1334 = vmatpush.msra.mxu0 0.0
    %1335 = vmatpush.msra.mxu0 0.0
    %1336 = vmatpush.msra.mxu0 %v829
    %1337 = vmatpush.msra.mxu0 %v828
    %1338 = vmatpush.msra.mxu0 %v827
    %1339 = vmatpush.msra.mxu0 %v826
    %1340 = vmatmul.f32.gmra.mxu0 %v1322
    %v1341 = vpop.f32.mrf.mxu0
    %v1342 = vadd.f32 0.0, %v1341
    %1343 = vdwg.mxu0
    %v1344 = vadd.f32 %v1321, %v1342
    %v1345 = vtanh.pop %v1344
    %v1346 = vxor.u32 %v1344, 2147483648
    %v1347 = vmul.f32 %v1346, 1.442695
    %v1348 = vpow.pop %v1347
    %v1349 = vadd.f32 %v1348, 1.0
    %v1350 = vrcp.pop %v1349
    %v1351 = vmul.f32 %v1349, %v1350
    %v1352 = vsub.f32 1.0, %v1351
    %v1353 = vmul.f32 %v1350, %v1352
    %v1354 = vadd.f32 %v1350, %v1353
    %vm1355 = vweird.f32 %v1349
    %vm1356 = vweird.f32 %v1350
    %vm1357 = vmor %vm1355, %vm1356
    %v1358 = vsel %vm1357, %v1350, %v1354
    %v1359 = vand.u32 2147483647, %v1349
    %vm1360 = vcmp.eq.f32.partialorder %v1359, 8.507059e+37
    %v1361 = vand.u32 %v1349, 2147483648
    %v1362 = vor.u32 1.1754944e-38, %v1361
    %v1363 = vsel %vm1360, %v1362, %v1358
    %v1364 = vmul.f32 1.0, %v1363
    %v1365 = vsel %vm188, %v1345, %v1364
    %v1366 = vmul.f32 %v1365, %v1309
    %1368 = vrot.lane.b32.xlu0 %v1365, 64
    %v1369 = vpop.permute.xlu0 %1368
    %v1371 = vmul.f32 %v1365, %v1369
    %1373 = vrot.lane.b32.xlu0 %v1371, 32
    %v1374 = vpop.permute.xlu0 %1373
    %v1376 = vadd.f32 %v1366, %v1374
    %v1377 = vtanh.pop %v1376
    %1379 = vrot.lane.b32.xlu0 %v1377, 64
    %v1380 = vpop.permute.xlu0 %1379
    %v1382 = vmul.f32 %v1365, %v1380
    %1384 = vrot.lane.b32.xlu0 %v1382, 32
    %v1385 = vpop.permute.xlu0 %1384
    %1387 = vst.msk [vmem:[%s754] sm:$0xff] %vm120, %v1385
    %v1388 = vld [vmem:[%s756] sm:$0xff]
    %v1389 = vsel %vm120, %v1385, 0
    %1391 = vmatpush.msra.mxu0 0.0
    %1392 = vmatpush.msra.mxu0 0.0
    %1393 = vmatpush.msra.mxu0 0.0
    %1394 = vmatpush.msra.mxu0 0.0
    %1395 = vmatpush.msra.mxu0 0.0
    %1396 = vmatpush.msra.mxu0 0.0
    %1397 = vmatpush.msra.mxu0 0.0
    %1398 = vmatpush.msra.mxu0 0.0
    %1399 = vmatpush.msra.mxu0 0.0
    %1400 = vmatpush.msra.mxu0 0.0
    %1401 = vmatpush.msra.mxu0 0.0
    %1402 = vmatpush.msra.mxu0 0.0
    %1403 = vmatpush.msra.mxu0 %v829
    %1404 = vmatpush.msra.mxu0 %v828
    %1405 = vmatpush.msra.mxu0 %v827
    %1406 = vmatpush.msra.mxu0 %v826
    %1407 = vmatmul.f32.gmra.mxu0 %v1389
    %v1408 = vpop.f32.mrf.mxu0
    %v1409 = vadd.f32 0.0, %v1408
    %1410 = vdwg.mxu0
    %v1411 = vadd.f32 %v1388, %v1409
    %v1412 = vtanh.pop %v1411
    %v1413 = vxor.u32 %v1411, 2147483648
    %v1414 = vmul.f32 %v1413, 1.442695
    %v1415 = vpow.pop %v1414
    %v1416 = vadd.f32 %v1415, 1.0
    %v1417 = vrcp.pop %v1416
    %v1418 = vmul.f32 %v1416, %v1417
    %v1419 = vsub.f32 1.0, %v1418
    %v1420 = vmul.f32 %v1417, %v1419
    %v1421 = vadd.f32 %v1417, %v1420
    %vm1422 = vweird.f32 %v1416
    %vm1423 = vweird.f32 %v1417
    %vm1424 = vmor %vm1422, %vm1423
    %v1425 = vsel %vm1424, %v1417, %v1421
    %v1426 = vand.u32 2147483647, %v1416
    %vm1427 = vcmp.eq.f32.partialorder %v1426, 8.507059e+37
    %v1428 = vand.u32 %v1416, 2147483648
    %v1429 = vor.u32 1.1754944e-38, %v1428
    %v1430 = vsel %vm1427, %v1429, %v1425
    %v1431 = vmul.f32 1.0, %v1430
    %v1432 = vsel %vm188, %v1412, %v1431
    %v1433 = vmul.f32 %v1432, %v1376
    %1435 = vrot.lane.b32.xlu0 %v1432, 64
    %v1436 = vpop.permute.xlu0 %1435
    %v1438 = vmul.f32 %v1432, %v1436
    %1440 = vrot.lane.b32.xlu0 %v1438, 32
    %v1441 = vpop.permute.xlu0 %1440
    %v1443 = vadd.f32 %v1433, %v1441
    %v1444 = vtanh.pop %v1443
    %1446 = vrot.lane.b32.xlu0 %v1444, 64
    %v1447 = vpop.permute.xlu0 %1446
    %v1449 = vmul.f32 %v1432, %v1447
    %1451 = vrot.lane.b32.xlu0 %v1449, 32
    %v1452 = vpop.permute.xlu0 %1451
    %1454 = vst.msk [vmem:[%s823] sm:$0xff] %vm120, %v1452
    %v1455 = vld [vmem:[#allocation2] sm:$0xff]
    %v1456 = vld [vmem:[#allocation2 + $0x8] sm:$0xff]
    %v1457 = vld [vmem:[#allocation2 + $0x10] sm:$0xff]
    %v1458 = vld [vmem:[#allocation2 + $0x18] sm:$0xff]
    %v1459 = vld [vmem:[#allocation2 + $0x20] sm:$0xff]
    %v1460 = vld [vmem:[#allocation2 + $0x28] sm:$0xff]
    %v1461 = vld [vmem:[#allocation2 + $0x30] sm:$0xff]
    %v1462 = vld [vmem:[#allocation2 + $0x38] sm:$0xff]
    %v1463 = vld [vmem:[#allocation6] sm:$0xff]
    %v1464 = vld [vmem:[#allocation6 + $0x8] sm:$0xff]
    %v1465 = vld [vmem:[#allocation6 + $0x10] sm:$0xff]
    %v1466 = vld [vmem:[#allocation6 + $0x18] sm:$0xff]
    %v1467 = vld [vmem:[%s6] sm:$0x1]
    %v1469 = vperm.slane %v1467, 0
    %v1472 = vsel %vm120, %v1455, 0
    %v1475 = vsel %vm120, %v1456, 0
    %v1478 = vsel %vm120, %v1457, 0
    %v1481 = vsel %vm120, %v1458, 0
    %v1484 = vsel %vm120, %v1459, 0
    %v1487 = vsel %vm120, %v1460, 0
    %v1490 = vsel %vm120, %v1461, 0
    %v1493 = vsel %vm120, %v1462, 0
    %1495 = vmatpush.msra.mxu0 0.0
    %1496 = vmatpush.msra.mxu0 0.0
    %1497 = vmatpush.msra.mxu0 0.0
    %1498 = vmatpush.msra.mxu0 0.0
    %1499 = vmatpush.msra.mxu0 0.0
    %1500 = vmatpush.msra.mxu0 0.0
    %1501 = vmatpush.msra.mxu0 0.0
    %1502 = vmatpush.msra.mxu0 0.0
    %1503 = vmatpush.msra.mxu0 0.0
    %1504 = vmatpush.msra.mxu0 0.0
    %1505 = vmatpush.msra.mxu0 0.0
    %1506 = vmatpush.msra.mxu0 0.0
    %1507 = vmatpush.msra.mxu0 %v1466
    %1508 = vmatpush.msra.mxu0 %v1465
    %1509 = vmatpush.msra.mxu0 %v1464
    %1510 = vmatpush.msra.mxu0 %v1463
    %1511 = vmatmul.f32.gmra.mxu0 %v1472
    %v1512 = vpop.f32.mrf.mxu0
    %v1513 = vadd.f32 %v1469, %v1512
    %1514 = vmatmul.f32.gmra.mxu0 %v1475
    %v1515 = vpop.f32.mrf.mxu0
    %v1516 = vadd.f32 %v1469, %v1515
    %1517 = vmatmul.f32.gmra.mxu0 %v1478
    %v1518 = vpop.f32.mrf.mxu0
    %v1519 = vadd.f32 %v1469, %v1518
    %1520 = vmatmul.f32.gmra.mxu0 %v1481
    %v1521 = vpop.f32.mrf.mxu0
    %v1522 = vadd.f32 %v1469, %v1521
    %1523 = vmatmul.f32.gmra.mxu0 %v1484
    %v1524 = vpop.f32.mrf.mxu0
    %v1525 = vadd.f32 %v1469, %v1524
    %1526 = vmatmul.f32.gmra.mxu0 %v1487
    %v1527 = vpop.f32.mrf.mxu0
    %v1528 = vadd.f32 %v1469, %v1527
    %1529 = vmatmul.f32.gmra.mxu0 %v1490
    %v1530 = vpop.f32.mrf.mxu0
    %v1531 = vadd.f32 %v1469, %v1530
    %1532 = vmatmul.f32.gmra.mxu0 %v1493
    %v1533 = vpop.f32.mrf.mxu0
    %v1534 = vadd.f32 %v1469, %v1533
    %1535 = vdwg.mxu0
    %1536 = vst [vmem:[%s7] sm:$0xff] %v1513
    %1537 = vst [vmem:[%s7 + $0x8] sm:$0xff] %v1516
    %1538 = vst [vmem:[%s7 + $0x10] sm:$0xff] %v1519
    %1539 = vst [vmem:[%s7 + $0x18] sm:$0xff] %v1522
    %1540 = vst [vmem:[%s7 + $0x20] sm:$0xff] %v1525
    %1541 = vst [vmem:[%s7 + $0x28] sm:$0xff] %v1528
    %1542 = vst [vmem:[%s7 + $0x30] sm:$0xff] %v1531
    %1543 = vst [vmem:[%s7 + $0x38] sm:$0xff] %v1534
    // Predicated region
    $region38: #{forward.1} parent=1 // pred_check
      _
    $region39: #{forward.1} parent=1 // pred_check_branch
      %1545 = sbr.rel (0) target = $region41
    $region40: #{forward.1} parent=1 // pred_region
      _
    $region41: #{forward.1} parent=1 // pred_fallthru
      _
    // Predicated region
    $region42: #{forward.1} parent=1 // pred_check
      _
    $region43: #{forward.1} parent=1 // pred_check_branch
      %1547 = sbr.rel (0) target = $region45
    $region44: #{forward.1} parent=1 // pred_region
      _
    $region45: #{forward.1} parent=1 // pred_fallthru
      _
    %1548 = vsyncpa [#allocation5], 1
    %1549 = vsyncpa [#allocation7], 1

</llo_original>
